<compile_context>
chip_gen: v6e
topology: v6e:2x2x1
jax: 0.10.0
libtpu: 0.0.40
codegen_flags: <defaults>
</compile_context>

<pallas_src>
import jax
import jax.numpy as jnp
from jax.experimental import pallas as pl
from jax.experimental.pallas import tpu as pltpu

HIDDEN = 256
LANE = 128
SUBLANE = 8


def _round_up(n, m):
    return ((n + m - 1) // m) * m


def _pick_tile_b(batch):
    """Prefer 256-row tiles (fills v6e/v7x MXU rows, multiple of 128 for v5e),
    but keep >= 2 grid steps when the batch allows (v7x has 2 TensorCores)."""
    if batch >= 512:
        return 256
    if batch > 256:
        return _round_up((batch + 1) // 2, SUBLANE)
    return max(SUBLANE, _round_up(batch, SUBLANE))


def dqn_kernel(x_ref, w1_ref, b1_ref, w2_ref, b2_ref, w3_ref, b3_ref, o_ref):
    # One batch tile per grid step; all three matmuls + bias + ReLU fused.
    # bf16 MXU operands, f32 accumulation, f32 bias/ReLU epilogue.
    x = x_ref[...]                                                       # (tb, K1) bf16
    h1 = jnp.dot(x, w1_ref[...], preferred_element_type=jnp.float32)    # (tb, 256) f32
    h1 = jnp.maximum(h1 + b1_ref[...], 0.0)
    h2 = jnp.dot(h1.astype(w2_ref.dtype), w2_ref[...],
                 preferred_element_type=jnp.float32)                    # (tb, 256) f32
    h2 = jnp.maximum(h2 + b2_ref[...], 0.0)
    q = jnp.dot(h2.astype(w3_ref.dtype), w3_ref[...],
                preferred_element_type=jnp.float32)                     # (tb, N3) f32
    o_ref[...] = (q + b3_ref[...]).astype(o_ref.dtype)


def dqn_forward(x, params, *, tile_b=None):
    """x: (B, obs_dim) float32. params: transposed weights (in, out) + (1, out) biases."""
    B, obs_dim = x.shape
    action_dim = params["w3"].shape[1]

    # Lane-dense padding of the contracted input dim and the output dim.
    k1 = _round_up(obs_dim, LANE)
    n3 = _round_up(action_dim, LANE)

    # Batch tiling: big M tiles; ragged batches handled by zero padding.
    if tile_b is None:
        tile_b = _pick_tile_b(B)
    tile_b = max(SUBLANE, _round_up(min(tile_b, _round_up(B, SUBLANE)), SUBLANE))
    bp = _round_up(B, tile_b)
    grid = (bp // tile_b,)

    # Pad + cast operands: bf16 MXU operands, f32 biases (f32 accumulation in kernel).
    xb = jnp.zeros((bp, k1), jnp.bfloat16).at[:B, :obs_dim].set(
        x.astype(jnp.bfloat16))
    w1 = jnp.zeros((k1, HIDDEN), jnp.bfloat16).at[:obs_dim, :].set(
        params["w1"].astype(jnp.bfloat16))
    w2 = params["w2"].astype(jnp.bfloat16)
    w3 = jnp.zeros((HIDDEN, n3), jnp.bfloat16).at[:, :action_dim].set(
        params["w3"].astype(jnp.bfloat16))
    b1 = params["b1"].astype(jnp.float32)
    b2 = params["b2"].astype(jnp.float32)
    b3 = jnp.zeros((1, n3), jnp.float32).at[:, :action_dim].set(
        params["b3"].astype(jnp.float32))

    # Weights/biases are small: keep full copies resident (constant block index).
    full = lambda shape: pl.BlockSpec(shape, lambda i: (0, 0))

    flops = 2 * bp * (k1 * HIDDEN + HIDDEN * HIDDEN + HIDDEN * n3)
    bytes_accessed = (
        xb.size * 2 + w1.size * 2 + w2.size * 2 + w3.size * 2
        + (b1.size + b2.size + b3.size) * 4 + bp * n3 * 4
    )

    out = pl.pallas_call(
        dqn_kernel,
        out_shape=jax.ShapeDtypeStruct((bp, n3), jnp.float32),
        grid_spec=pltpu.PrefetchScalarGridSpec(
            num_scalar_prefetch=0,
            grid=grid,
            in_specs=[
                pl.BlockSpec((tile_b, k1), lambda i: (i, 0)),   # x batch tile
                full((k1, HIDDEN)),                             # w1
                full((1, HIDDEN)),                              # b1
                full((HIDDEN, HIDDEN)),                         # w2
                full((1, HIDDEN)),                              # b2
                full((HIDDEN, n3)),                             # w3 (lane-padded)
                full((1, n3)),                                  # b3 (lane-padded)
            ],
            out_specs=pl.BlockSpec((tile_b, n3), lambda i: (i, 0)),
        ),
        compiler_params=pltpu.CompilerParams(
            dimension_semantics=("parallel",)
        ),
        cost_estimate=pl.CostEstimate(
            flops=flops, transcendentals=0, bytes_accessed=bytes_accessed),
    )(xb, w1, b1, w2, b2, w3, b3)

    # Slice away batch and action-dim padding (pads are exact zeros -> bit-identical).
    return out[:B, :action_dim]


def init_params(key, obs_dim, action_dim):
    """PyTorch nn.Linear default init (uniform +-1/sqrt(fan_in)).
    Weights stored transposed: (in_features, out_features)."""
    ks = jax.random.split(key, 6)

    def linear(kw, kb, fan_in, fan_out):
        bound = 1.0 / jnp.sqrt(float(fan_in))
        w = jax.random.uniform(kw, (fan_in, fan_out), jnp.float32, -bound, bound)
        b = jax.random.uniform(kb, (1, fan_out), jnp.float32, -bound, bound)
        return w, b

    w1, b1 = linear(ks[0], ks[1], obs_dim, HIDDEN)
    w2, b2 = linear(ks[2], ks[3], HIDDEN, HIDDEN)
    w3, b3 = linear(ks[4], ks[5], HIDDEN, action_dim)
    return {"w1": w1, "b1": b1, "w2": w2, "b2": b2, "w3": w3, "b3": b3}


def dqn_reference(x, p):
    """Same math as the kernel (bf16 MXU operands, f32 accumulation) in plain JAX."""
    xb = x.astype(jnp.bfloat16)
    w1 = p["w1"].astype(jnp.bfloat16)
    w2 = p["w2"].astype(jnp.bfloat16)
    w3 = p["w3"].astype(jnp.bfloat16)
    h1 = jnp.maximum(jnp.dot(xb, w1, preferred_element_type=jnp.float32) + p["b1"], 0.0)
    h2 = jnp.maximum(jnp.dot(h1.astype(jnp.bfloat16), w2,
                             preferred_element_type=jnp.float32) + p["b2"], 0.0)
    return jnp.dot(h2.astype(jnp.bfloat16), w3,
                   preferred_element_type=jnp.float32) + p["b3"]


if __name__ == "__main__":
    key = jax.random.PRNGKey(0)
    k_param, k_x1, k_x2 = jax.random.split(key, 3)

    obs_dim, action_dim = 16, 6
    params = init_params(k_param, obs_dim, action_dim)

    # Aligned batch: 512 -> tile_b=256, grid=(2,) (keeps both v7x TCs busy).
    x1 = jax.random.normal(k_x1, (512, obs_dim), jnp.float32)
    out1 = jax.block_until_ready(dqn_forward(x1, params))
    ref1 = dqn_reference(x1, params)
    assert out1.shape == (512, action_dim)
    assert jnp.allclose(out1, ref1, atol=5e-3, rtol=5e-3), "mismatch (aligned batch)"

    # Ragged small batch: exercises the zero-pad path (no divisibility assert).
    x2 = jax.random.normal(k_x2, (12, obs_dim), jnp.float32)
    out2 = jax.block_until_ready(dqn_forward(x2, params))
    ref2 = dqn_reference(x2, params)
    assert out2.shape == (12, action_dim)
    assert jnp.allclose(out2, ref2, atol=5e-3, rtol=5e-3), "mismatch (ragged batch)"

    print("KERNEL_OK")
</pallas_src>

<mosaic_0001>
module attributes {stable_mosaic.version = 11 : i64} {
  func.func @dqn_kernel(%arg0: i32, %arg1: memref<256x128xbf16, #tpu.memory_space<vmem>>, %arg2: memref<128x256xbf16, #tpu.memory_space<vmem>>, %arg3: memref<1x256xf32, #tpu.memory_space<vmem>>, %arg4: memref<256x256xbf16, #tpu.memory_space<vmem>>, %arg5: memref<1x256xf32, #tpu.memory_space<vmem>>, %arg6: memref<256x128xbf16, #tpu.memory_space<vmem>>, %arg7: memref<1x128xf32, #tpu.memory_space<vmem>>, %arg8: memref<256x128xf32, #tpu.memory_space<vmem>>) attributes {dimension_semantics = [#tpu.dimension_semantics<parallel>], iteration_bounds = array<i64: 2>, scalar_prefetch = 0 : i64, scratch_operands = 0 : i64, tpu.core_type = #tpu.core_type<tc>, window_params = [{transform_indices = @transform_0, window_bounds = array<i64: 256, 128>}, {pipeline_mode = #tpu.pipeline_mode<synchronous>, transform_indices = @transform_1, window_bounds = array<i64: 128, 256>}, {pipeline_mode = #tpu.pipeline_mode<synchronous>, transform_indices = @transform_2, window_bounds = array<i64: 1, 256>}, {pipeline_mode = #tpu.pipeline_mode<synchronous>, transform_indices = @transform_3, window_bounds = array<i64: 256, 256>}, {pipeline_mode = #tpu.pipeline_mode<synchronous>, transform_indices = @transform_4, window_bounds = array<i64: 1, 256>}, {pipeline_mode = #tpu.pipeline_mode<synchronous>, transform_indices = @transform_5, window_bounds = array<i64: 256, 128>}, {pipeline_mode = #tpu.pipeline_mode<synchronous>, transform_indices = @transform_6, window_bounds = array<i64: 1, 128>}, {transform_indices = @transform_7, window_bounds = array<i64: 256, 128>}]} {
    %c0 = arith.constant 0 : index
    %c0_0 = arith.constant 0 : index
    %0 = vector.load %arg1[%c0, %c0_0] : memref<256x128xbf16, #tpu.memory_space<vmem>>, vector<256x128xbf16>
    %c0_1 = arith.constant 0 : index
    %c0_2 = arith.constant 0 : index
    %1 = vector.load %arg2[%c0_1, %c0_2] : memref<128x256xbf16, #tpu.memory_space<vmem>>, vector<128x256xbf16>
    %cst = arith.constant dense<0.000000e+00> : vector<256x256xf32>
    %2 = tpu.matmul %0, %1, %cst {dimension_numbers = #tpu.dot_dimension_numbers<[1], [0], [0], [1], [0, 0, 1, 1], [], []>} : vector<256x128xbf16>, vector<128x256xbf16>, vector<256x256xf32> -> vector<256x256xf32>
    %c0_3 = arith.constant 0 : index
    %c0_4 = arith.constant 0 : index
    %3 = vector.load %arg3[%c0_3, %c0_4] : memref<1x256xf32, #tpu.memory_space<vmem>>, vector<1x256xf32>
    %4 = vector.broadcast %3 : vector<1x256xf32> to vector<256x256xf32>
    %5 = arith.addf %2, %4 : vector<256x256xf32>
    %cst_5 = arith.constant 0.000000e+00 : f32
    %6 = vector.broadcast %cst_5 : f32 to vector<256x256xf32>
    %7 = arith.maximumf %5, %6 : vector<256x256xf32>
    %8 = arith.truncf %7 : vector<256x256xf32> to vector<256x256xbf16>
    %c0_6 = arith.constant 0 : index
    %c0_7 = arith.constant 0 : index
    %9 = vector.load %arg4[%c0_6, %c0_7] : memref<256x256xbf16, #tpu.memory_space<vmem>>, vector<256x256xbf16>
    %cst_8 = arith.constant dense<0.000000e+00> : vector<256x256xf32>
    %10 = tpu.matmul %8, %9, %cst_8 {dimension_numbers = #tpu.dot_dimension_numbers<[1], [0], [0], [1], [0, 0, 1, 1], [], []>} : vector<256x256xbf16>, vector<256x256xbf16>, vector<256x256xf32> -> vector<256x256xf32>
    %c0_9 = arith.constant 0 : index
    %c0_10 = arith.constant 0 : index
    %11 = vector.load %arg5[%c0_9, %c0_10] : memref<1x256xf32, #tpu.memory_space<vmem>>, vector<1x256xf32>
    %12 = vector.broadcast %11 : vector<1x256xf32> to vector<256x256xf32>
    %13 = arith.addf %10, %12 : vector<256x256xf32>
    %cst_11 = arith.constant 0.000000e+00 : f32
    %14 = vector.broadcast %cst_11 : f32 to vector<256x256xf32>
    %15 = arith.maximumf %13, %14 : vector<256x256xf32>
    %16 = arith.truncf %15 : vector<256x256xf32> to vector<256x256xbf16>
    %c0_12 = arith.constant 0 : index
    %c0_13 = arith.constant 0 : index
    %17 = vector.load %arg6[%c0_12, %c0_13] : memref<256x128xbf16, #tpu.memory_space<vmem>>, vector<256x128xbf16>
    %cst_14 = arith.constant dense<0.000000e+00> : vector<256x128xf32>
    %18 = tpu.matmul %16, %17, %cst_14 {dimension_numbers = #tpu.dot_dimension_numbers<[1], [0], [0], [1], [0, 0, 1, 1], [], []>} : vector<256x256xbf16>, vector<256x128xbf16>, vector<256x128xf32> -> vector<256x128xf32>
    %c0_15 = arith.constant 0 : index
    %c0_16 = arith.constant 0 : index
    %19 = vector.load %arg7[%c0_15, %c0_16] : memref<1x128xf32, #tpu.memory_space<vmem>>, vector<1x128xf32>
    %20 = vector.broadcast %19 : vector<1x128xf32> to vector<256x128xf32>
    %21 = arith.addf %18, %20 : vector<256x128xf32>
    %c0_17 = arith.constant 0 : index
    %c0_18 = arith.constant 0 : index
    %22 = vector.load %arg8[%c0_17, %c0_18] : memref<256x128xf32, #tpu.memory_space<vmem>>, vector<256x128xf32>
    tpu.vector_store %arg8[%c0_17, %c0_18], %21 {strides = array<i32>} : memref<256x128xf32, #tpu.memory_space<vmem>>, vector<256x128xf32>,
    return
  }
  func.func @transform_0(%arg0: i32) -> (i32, i32) {
    %c0_i32 = arith.constant 0 : i32
    %c0_i32_0 = arith.constant 0 : i32
    return %arg0, %c0_i32 : i32, i32
  }
  func.func @transform_1(%arg0: i32) -> (i32, i32) {
    %c0_i32 = arith.constant 0 : i32
    %c0_i32_0 = arith.constant 0 : i32
    %c0_i32_1 = arith.constant 0 : i32
    return %c0_i32, %c0_i32_0 : i32, i32
  }
  func.func @transform_2(%arg0: i32) -> (i32, i32) {
    %c0_i32 = arith.constant 0 : i32
    %c0_i32_0 = arith.constant 0 : i32
    %c0_i32_1 = arith.constant 0 : i32
    return %c0_i32, %c0_i32_0 : i32, i32
  }
  func.func @transform_3(%arg0: i32) -> (i32, i32) {
    %c0_i32 = arith.constant 0 : i32
    %c0_i32_0 = arith.constant 0 : i32
    %c0_i32_1 = arith.constant 0 : i32
    return %c0_i32, %c0_i32_0 : i32, i32
  }
  func.func @transform_4(%arg0: i32) -> (i32, i32) {
    %c0_i32 = arith.constant 0 : i32
    %c0_i32_0 = arith.constant 0 : i32
    %c0_i32_1 = arith.constant 0 : i32
    return %c0_i32, %c0_i32_0 : i32, i32
  }
  func.func @transform_5(%arg0: i32) -> (i32, i32) {
    %c0_i32 = arith.constant 0 : i32
    %c0_i32_0 = arith.constant 0 : i32
    %c0_i32_1 = arith.constant 0 : i32
    return %c0_i32, %c0_i32_0 : i32, i32
  }
  func.func @transform_6(%arg0: i32) -> (i32, i32) {
    %c0_i32 = arith.constant 0 : i32
    %c0_i32_0 = arith.constant 0 : i32
    %c0_i32_1 = arith.constant 0 : i32
    return %c0_i32, %c0_i32_0 : i32, i32
  }
  func.func @transform_7(%arg0: i32) -> (i32, i32) {
    %c0_i32 = arith.constant 0 : i32
    %c0_i32_0 = arith.constant 0 : i32
    return %arg0, %c0_i32 : i32, i32
  }
}

</mosaic_0001>

<llo_original>
// kernel: tpu_custom_call.1
$region0: #{tpu_custom_call.1}
  #allocation0 [shape = 'u32[]', space=smem, size = 0x4, offset = 0x4, fixed_abs, tag = 'smem constant byte address 0x4 - core index']
  #allocation1 [shape = 'u32[144,128]{1,0:T(1,128)}', space=vmem, size = 0x12000, scoped, tag = 'internal scratch']
  %s0 = inlined_call_operand.hbm [shape: bf16[512,128], index: 0, kind: input, shape index: {}]
  %s1 = inlined_call_operand.hbm [shape: bf16[128,256], index: 1, kind: input, shape index: {}]
  %s2 = inlined_call_operand.vmem [shape: f32[1,256], index: 2, kind: input, shape index: {}]
  %s3 = inlined_call_operand.hbm [shape: bf16[256,256], index: 3, kind: input, shape index: {}]
  %s4 = inlined_call_operand.vmem [shape: f32[1,256], index: 4, kind: input, shape index: {}]
  %s5 = inlined_call_operand.hbm [shape: bf16[256,128], index: 5, kind: input, shape index: {}]
  %s6 = inlined_call_operand.vmem [shape: f32[1,128], index: 6, kind: input, shape index: {}]
  %s7 = inlined_call_operand.hbm [shape: f32[512,128], index: 7, kind: output, shape index: {}]
  %s8 = sld [smem:[#allocation0]]
  $region77: #{tpu_custom_call.1} parent=0
    _
  %s10 = ssub.s32 1, %s8
  %s11 = scalar_select 0, %s10, %s8
  $region1: #{tpu_custom_call.1} parent=0
    #allocation2 [shape = 'u8[131072]{0}', space=vmem, size = 0x20000, scoped, tag = 'input window, operand 0']
    #allocation3 [shape = 's32[2]{0}', space=sflag, size = 0x8, scoped, tag = 'scoped memory for tpu_custom_call.1']
    #allocation4 [shape = 's32[2]{0}', space=sflag, size = 0x8, scoped, tag = 'scoped memory for tpu_custom_call.1']
    #allocation5 [shape = 'u8[65536]{0}', space=vmem, size = 0x10000, scoped, tag = 'input window, operand 1, single buffered']
    #allocation6 [shape = 's32[1]{0}', space=sflag, size = 0x4, scoped, tag = 'scoped memory for tpu_custom_call.1']
    #allocation7 [shape = 'u8[131072]{0}', space=vmem, size = 0x20000, scoped, tag = 'input window, operand 3, single buffered']
    #allocation8 [shape = 'u8[65536]{0}', space=vmem, size = 0x10000, scoped, tag = 'input window, operand 5, single buffered']
    #allocation9 [shape = 's32[1]{0}', space=sflag, size = 0x4, scoped, tag = 'scoped memory for tpu_custom_call.1']
    #allocation10 [shape = 'u8[262144]{0}', space=vmem, size = 0x40000, scoped, tag = 'output window, operand 0']
    %12 = vsyncpa [#allocation3], 0
    %s13 = scalar_lea.sflag [#allocation3], 1
    %14 = vsyncpa %s13, 0
    %15 = vsyncpa [#allocation6], 0
    %16 = vsyncpa [#allocation9], 0
    %17 = vsyncpa [#allocation4], 0
    %s18 = scalar_lea.sflag [#allocation4], 1
    %19 = vsyncpa %s18, 0
    loop: start=0, step=1, limit=4
    $region2: #{tpu_custom_call.1} parent=1 // loop_pre_header
      _
    $region3: #{tpu_custom_call.1} parent=1 // loop_header
      %s21 = sphi 0, %s25
      %p22 = scmp.ge.s32.totalorder %s21, 4
      %s31 = sphi 0, %s33
      %s34 = sphi 0, %s31
      %s35 = sphi 0, %s34
      %s51 = sphi 0, %s35
      %s55 = sphi 0, %s55
      %s57 = sphi 0, %s55
      %s58 = sphi 0, %s57
      %s72 = sphi 0, %s58
      %s76 = sphi 0, %s76
      %s78 = sphi 0, %s76
      %s79 = sphi 0, %s78
      %s93 = sphi 0, %s79
      %s97 = sphi 0, %s97
      %s99 = sphi 0, %s97
      %s100 = sphi 0, %s99
      %s114 = sphi 0, %s100
      %s118 = sphi 0, %s118
      %s120 = sphi 0, %s118
      %s121 = sphi 0, %s120
      %s135 = sphi 0, %s121
      %s139 = sphi 0, %s139
      %s141 = sphi 0, %s139
      %s142 = sphi 0, %s141
      %s156 = sphi 0, %s142
      %s160 = sphi 0, %s160
      %s162 = sphi 0, %s160
      %s163 = sphi 0, %s162
      %s177 = sphi 0, %s163
      %s183 = sphi 0, %s185
      %s186 = sphi 0, %s183
      %s187 = sphi 0, %s186
      %s203 = sphi 0, %s187
    $region4: #{tpu_custom_call.1} parent=1 // loop_header_branch
      %24 = sbr.rel (%p22) target = $region8
    $region5: #{tpu_custom_call.1} parent=1 // loop_body
      %s26 = ssub.s32 %s21, 1
      %s27 = ssub.s32 %s21, 2
      %s28 = sadd.s32 %s21, 1
      %s29 = ssub.s32 %s21, %s28
      %p30 = scmp.eq.s32.totalorder %s29, 0
      %s32 = sadd.s32 %s31, 1
      %s33 = scalar_select %p30, %s31, %s32
      %p36 = pneg %p30
      %p37 = scmp.eq.s32.totalorder %s21, 1
      %p38 = por %p36, %p37
      %p39 = scmp.ne.s32.totalorder %s31, %s34
      %p40 = scmp.eq.s32.totalorder %s21, 0
      %p41 = por %p39, %p40
      %p42 = scmp.ne.s32.totalorder %s31, %s34
      %p43 = scmp.eq.s32.totalorder %s26, 1
      %p44 = por %p42, %p43
      %p45 = scmp.ne.s32.totalorder %s34, %s35
      %p46 = scmp.eq.s32.totalorder %s26, 0
      %p47 = por %p45, %p46
      %p48 = scmp.ne.s32.totalorder %s34, %s35
      %p49 = scmp.eq.s32.totalorder %s27, 1
      %p50 = por %p48, %p49
      %p52 = scmp.ne.s32.totalorder %s35, %s51
      %p53 = scmp.eq.s32.totalorder %s27, 0
      %p54 = por %p52, %p53
      %s56 = sadd.s32 %s55, 1
      %p59 = scmp.eq.s32.totalorder %s21, 1
      %p60 = scmp.ne.s32.totalorder %s55, %s57
      %p61 = scmp.eq.s32.totalorder %s21, 0
      %p62 = por %p60, %p61
      %p63 = scmp.ne.s32.totalorder %s55, %s57
      %p64 = scmp.eq.s32.totalorder %s26, 1
      %p65 = por %p63, %p64
      %p66 = scmp.ne.s32.totalorder %s57, %s58
      %p67 = scmp.eq.s32.totalorder %s26, 0
      %p68 = por %p66, %p67
      %p69 = scmp.ne.s32.totalorder %s57, %s58
      %p70 = scmp.eq.s32.totalorder %s27, 1
      %p71 = por %p69, %p70
      %p73 = scmp.ne.s32.totalorder %s58, %s72
      %p74 = scmp.eq.s32.totalorder %s27, 0
      %p75 = por %p73, %p74
      %s77 = sadd.s32 %s76, 1
      %p80 = scmp.eq.s32.totalorder %s21, 1
      %p81 = scmp.ne.s32.totalorder %s76, %s78
      %p82 = scmp.eq.s32.totalorder %s21, 0
      %p83 = por %p81, %p82
      %p84 = scmp.ne.s32.totalorder %s76, %s78
      %p85 = scmp.eq.s32.totalorder %s26, 1
      %p86 = por %p84, %p85
      %p87 = scmp.ne.s32.totalorder %s78, %s79
      %p88 = scmp.eq.s32.totalorder %s26, 0
      %p89 = por %p87, %p88
      %p90 = scmp.ne.s32.totalorder %s78, %s79
      %p91 = scmp.eq.s32.totalorder %s27, 1
      %p92 = por %p90, %p91
      %p94 = scmp.ne.s32.totalorder %s79, %s93
      %p95 = scmp.eq.s32.totalorder %s27, 0
      %p96 = por %p94, %p95
      %s98 = sadd.s32 %s97, 1
      %p101 = scmp.eq.s32.totalorder %s21, 1
      %p102 = scmp.ne.s32.totalorder %s97, %s99
      %p103 = scmp.eq.s32.totalorder %s21, 0
      %p104 = por %p102, %p103
      %p105 = scmp.ne.s32.totalorder %s97, %s99
      %p106 = scmp.eq.s32.totalorder %s26, 1
      %p107 = por %p105, %p106
      %p108 = scmp.ne.s32.totalorder %s99, %s100
      %p109 = scmp.eq.s32.totalorder %s26, 0
      %p110 = por %p108, %p109
      %p111 = scmp.ne.s32.totalorder %s99, %s100
      %p112 = scmp.eq.s32.totalorder %s27, 1
      %p113 = por %p111, %p112
      %p115 = scmp.ne.s32.totalorder %s100, %s114
      %p116 = scmp.eq.s32.totalorder %s27, 0
      %p117 = por %p115, %p116
      %s119 = sadd.s32 %s118, 1
      %p122 = scmp.eq.s32.totalorder %s21, 1
      %p123 = scmp.ne.s32.totalorder %s118, %s120
      %p124 = scmp.eq.s32.totalorder %s21, 0
      %p125 = por %p123, %p124
      %p126 = scmp.ne.s32.totalorder %s118, %s120
      %p127 = scmp.eq.s32.totalorder %s26, 1
      %p128 = por %p126, %p127
      %p129 = scmp.ne.s32.totalorder %s120, %s121
      %p130 = scmp.eq.s32.totalorder %s26, 0
      %p131 = por %p129, %p130
      %p132 = scmp.ne.s32.totalorder %s120, %s121
      %p133 = scmp.eq.s32.totalorder %s27, 1
      %p134 = por %p132, %p133
      %p136 = scmp.ne.s32.totalorder %s121, %s135
      %p137 = scmp.eq.s32.totalorder %s27, 0
      %p138 = por %p136, %p137
      %s140 = sadd.s32 %s139, 1
      %p143 = scmp.eq.s32.totalorder %s21, 1
      %p144 = scmp.ne.s32.totalorder %s139, %s141
      %p145 = scmp.eq.s32.totalorder %s21, 0
      %p146 = por %p144, %p145
      %p147 = scmp.ne.s32.totalorder %s139, %s141
      %p148 = scmp.eq.s32.totalorder %s26, 1
      %p149 = por %p147, %p148
      %p150 = scmp.ne.s32.totalorder %s141, %s142
      %p151 = scmp.eq.s32.totalorder %s26, 0
      %p152 = por %p150, %p151
      %p153 = scmp.ne.s32.totalorder %s141, %s142
      %p154 = scmp.eq.s32.totalorder %s27, 1
      %p155 = por %p153, %p154
      %p157 = scmp.ne.s32.totalorder %s142, %s156
      %p158 = scmp.eq.s32.totalorder %s27, 0
      %p159 = por %p157, %p158
      %s161 = sadd.s32 %s160, 1
      %p164 = scmp.eq.s32.totalorder %s21, 1
      %p165 = scmp.ne.s32.totalorder %s160, %s162
      %p166 = scmp.eq.s32.totalorder %s21, 0
      %p167 = por %p165, %p166
      %p168 = scmp.ne.s32.totalorder %s160, %s162
      %p169 = scmp.eq.s32.totalorder %s26, 1
      %p170 = por %p168, %p169
      %p171 = scmp.ne.s32.totalorder %s162, %s163
      %p172 = scmp.eq.s32.totalorder %s26, 0
      %p173 = por %p171, %p172
      %p174 = scmp.ne.s32.totalorder %s162, %s163
      %p175 = scmp.eq.s32.totalorder %s27, 1
      %p176 = por %p174, %p175
      %p178 = scmp.ne.s32.totalorder %s163, %s177
      %p179 = scmp.eq.s32.totalorder %s27, 0
      %p180 = por %p178, %p179
      %s181 = ssub.s32 %s21, %s28
      %p182 = scmp.eq.s32.totalorder %s181, 0
      %s184 = sadd.s32 %s183, 1
      %s185 = scalar_select %p182, %s183, %s184
      %p188 = pneg %p182
      %p189 = scmp.eq.s32.totalorder %s21, 1
      %p190 = por %p188, %p189
      %p191 = scmp.ne.s32.totalorder %s183, %s186
      %p192 = scmp.eq.s32.totalorder %s21, 0
      %p193 = por %p191, %p192
      %p194 = scmp.ne.s32.totalorder %s183, %s186
      %p195 = scmp.eq.s32.totalorder %s26, 1
      %p196 = por %p194, %p195
      %p197 = scmp.ne.s32.totalorder %s186, %s187
      %p198 = scmp.eq.s32.totalorder %s26, 0
      %p199 = por %p197, %p198
      %p200 = scmp.ne.s32.totalorder %s186, %s187
      %p201 = scmp.eq.s32.totalorder %s27, 1
      %p202 = por %p200, %p201
      %p204 = scmp.ne.s32.totalorder %s187, %s203
      %p205 = scmp.eq.s32.totalorder %s27, 0
      %p206 = por %p204, %p205
      %p207 = scmp.le.s32.totalorder 1, %s21
      %p208 = scmp.lt.s32.totalorder %s21, 3
      %p209 = pnand %p207, %p208
      %p210 = pneg %p209
      // Predicated region
      $region9: #{tpu_custom_call.1} parent=5 // pred_check
        _
      $region10: #{tpu_custom_call.1} parent=5 // pred_check_branch
        %212 = sbr.rel (%p209) target = $region12
      $region11: #{tpu_custom_call.1} parent=5 // pred_region
        %s213 = ssub.s32 %s21, 1
        // Predicated region
        $region13: #{tpu_custom_call.1} parent=11 // pred_check
          %p214 = pneg %p68
        $region14: #{tpu_custom_call.1} parent=11 // pred_check_branch
          %216 = sbr.rel (%p214) target = $region16
        $region15: #{tpu_custom_call.1} parent=11 // pred_region
          %s218 = ssub.s32 2048, 2048
          %219 = vsyncadd [#allocation6], %s218
          %s220 = sshll.u32 [#allocation5], 4
          %s221 = int_to_ptr.vmem [resolvable:$true] %s220
          %226 = dma.hbm_to_vmem [thread:$0]  %s1, 2048, %s221, [#allocation6], 128, 128, 8
        $region16: #{tpu_custom_call.1} parent=11 // pred_fallthru
          _
        // Predicated region
        $region17: #{tpu_custom_call.1} parent=11 // pred_check
          %p227 = pneg %p89
        $region18: #{tpu_custom_call.1} parent=11 // pred_check_branch
          %229 = sbr.rel (%p227) target = $region20
        $region19: #{tpu_custom_call.1} parent=11 // pred_region
          _
        $region20: #{tpu_custom_call.1} parent=11 // pred_fallthru
          _
        // Predicated region
        $region21: #{tpu_custom_call.1} parent=11 // pred_check
          %p230 = pneg %p110
        $region22: #{tpu_custom_call.1} parent=11 // pred_check_branch
          %232 = sbr.rel (%p230) target = $region24
        $region23: #{tpu_custom_call.1} parent=11 // pred_region
          %s234 = ssub.s32 4096, 4096
          %235 = vsyncadd [#allocation6], %s234
          %s236 = sshll.u32 [#allocation7], 4
          %s237 = int_to_ptr.vmem [resolvable:$true] %s236
          %242 = dma.hbm_to_vmem [thread:$0]  %s3, 4096, %s237, [#allocation6], 128, 128, 8
        $region24: #{tpu_custom_call.1} parent=11 // pred_fallthru
          _
        // Predicated region
        $region25: #{tpu_custom_call.1} parent=11 // pred_check
          %p243 = pneg %p131
        $region26: #{tpu_custom_call.1} parent=11 // pred_check_branch
          %245 = sbr.rel (%p243) target = $region28
        $region27: #{tpu_custom_call.1} parent=11 // pred_region
          _
        $region28: #{tpu_custom_call.1} parent=11 // pred_fallthru
          _
        // Predicated region
        $region29: #{tpu_custom_call.1} parent=11 // pred_check
          %p246 = pneg %p152
        $region30: #{tpu_custom_call.1} parent=11 // pred_check_branch
          %248 = sbr.rel (%p246) target = $region32
        $region31: #{tpu_custom_call.1} parent=11 // pred_region
          %s250 = ssub.s32 2048, 2048
          %251 = vsyncadd [#allocation9], %s250
          %s252 = sshll.u32 [#allocation8], 4
          %s253 = int_to_ptr.vmem [resolvable:$true] %s252
          %258 = dma.hbm_to_vmem [thread:$0]  %s5, 2048, %s253, [#allocation9], 64, 64, 4
        $region32: #{tpu_custom_call.1} parent=11 // pred_fallthru
          _
        // Predicated region
        $region33: #{tpu_custom_call.1} parent=11 // pred_check
          %p259 = pneg %p173
        $region34: #{tpu_custom_call.1} parent=11 // pred_check_branch
          %261 = sbr.rel (%p259) target = $region36
        $region35: #{tpu_custom_call.1} parent=11 // pred_region
          _
        $region36: #{tpu_custom_call.1} parent=11 // pred_fallthru
          _
      $region12: #{tpu_custom_call.1} parent=5 // pred_fallthru
        _
      %p262 = scmp.lt.s32.totalorder %s21, 2
      // Predicated region
      $region37: #{tpu_custom_call.1} parent=5 // pred_check
        %p263 = pneg %p262
      $region38: #{tpu_custom_call.1} parent=5 // pred_check_branch
        %265 = sbr.rel (%p263) target = $region40
      $region39: #{tpu_custom_call.1} parent=5 // pred_region
        // Predicated region
        $region41: #{tpu_custom_call.1} parent=39 // pred_check
          %p266 = pneg %p41
        $region42: #{tpu_custom_call.1} parent=39 // pred_check_branch
          %268 = sbr.rel (%p266) target = $region44
        $region43: #{tpu_custom_call.1} parent=39 // pred_region
          %s269 = sand.u32 %s31, 1
          %s270 = scalar_lea.sflag [#allocation3], %s269
          %s271 = sand.u32 %s31, 1
          %s272 = smul.addr %s271, 128
          %s273 = scalar_lea.vmem [#allocation2], %s272
          %s274 = smul.u32 32, %s21
          %s276 = ssub.s32 2048, 2048
          %277 = vsyncadd %s270, %s276
          %s278 = smul.addr %s274, 64
          %s279 = scalar_lea.hbm %s0, %s278
          %s280 = sshll.u32 %s273, 4
          %s281 = int_to_ptr.vmem [resolvable:$true] %s280
          %286 = dma.hbm_to_vmem [thread:$0]  %s279, 2048, %s281, %s270, 64, 64, 4
        $region44: #{tpu_custom_call.1} parent=39 // pred_fallthru
          _
      $region40: #{tpu_custom_call.1} parent=5 // pred_fallthru
        _
      %p287 = scmp.le.s32.totalorder 1, %s21
      %p288 = scmp.lt.s32.totalorder %s21, 3
      %p289 = pnand %p287, %p288
      %p290 = pneg %p289
      // Predicated region
      $region45: #{tpu_custom_call.1} parent=5 // pred_check
        _
      $region46: #{tpu_custom_call.1} parent=5 // pred_check_branch
        %292 = sbr.rel (%p289) target = $region48
      $region47: #{tpu_custom_call.1} parent=5 // pred_region
        %s293 = ssub.s32 %s21, 1
        %s294 = sand.u32 %s34, 1
        %s295 = scalar_lea.sflag [#allocation3], %s294
        %s296 = sand.u32 %s34, 1
        %s297 = smul.addr %s296, 128
        %s298 = scalar_lea.vmem [#allocation2], %s297
        // Predicated region
        $region49: #{tpu_custom_call.1} parent=47 // pred_check
          %p299 = pneg %p47
        $region50: #{tpu_custom_call.1} parent=47 // pred_check_branch
          %301 = sbr.rel (%p299) target = $region52
        $region51: #{tpu_custom_call.1} parent=47 // pred_region
          %302 = dma.done %s295, 2048
        $region52: #{tpu_custom_call.1} parent=47 // pred_fallthru
          _
        // Predicated region
        $region53: #{tpu_custom_call.1} parent=47 // pred_check
          %p303 = pneg %p68
        $region54: #{tpu_custom_call.1} parent=47 // pred_check_branch
          %305 = sbr.rel (%p303) target = $region56
        $region55: #{tpu_custom_call.1} parent=47 // pred_region
          %306 = dma.done [#allocation6], 2048
        $region56: #{tpu_custom_call.1} parent=47 // pred_fallthru
          _
        // Predicated region
        $region57: #{tpu_custom_call.1} parent=47 // pred_check
          %p307 = pneg %p110
        $region58: #{tpu_custom_call.1} parent=47 // pred_check_branch
          %309 = sbr.rel (%p307) target = $region60
        $region59: #{tpu_custom_call.1} parent=47 // pred_region
          %310 = dma.done [#allocation6], 4096
        $region60: #{tpu_custom_call.1} parent=47 // pred_fallthru
          _
        // Predicated region
        $region61: #{tpu_custom_call.1} parent=47 // pred_check
          %p311 = pneg %p152
        $region62: #{tpu_custom_call.1} parent=47 // pred_check_branch
          %313 = sbr.rel (%p311) target = $region64
        $region63: #{tpu_custom_call.1} parent=47 // pred_region
          %314 = dma.done [#allocation9], 2048
        $region64: #{tpu_custom_call.1} parent=47 // pred_fallthru
          _
        %s315 = sand.u32 %s34, 1
        %s316 = scalar_lea.sflag [#allocation3], %s315
        %s317 = sand.u32 %s34, 1
        %s318 = smul.addr %s317, 128
        %s319 = scalar_lea.vmem [#allocation2], %s318
        %p320 = pneg %p47
        %p321 = pneg %p44
        %p322 = pneg %p68
        %p323 = pneg %p65
        %p324 = pneg %p89
        %p325 = pneg %p86
        %p326 = pneg %p110
        %p327 = pneg %p107
        %p328 = pneg %p131
        %p329 = pneg %p128
        %p330 = pneg %p152
        %p331 = pneg %p149
        %p332 = pneg %p173
        %p333 = pneg %p170
        %p334 = pneg %p199
        %p335 = pneg %p196
        %s336 = sand.u32 %s186, 1
        %s337 = scalar_lea.sflag [#allocation4], %s336
        %s338 = sand.u32 %s186, 1
        %s339 = smul.addr %s338, 256
        %s340 = scalar_lea.vmem [#allocation10], %s339
        %s341 = smul.u32 32, %s26
        %s342 = smul.u32 32, %s26
        %v344 = vld [vmem:[%s298] sm:$0xf]
        %v345 = vld [vmem:[%s298 + $0x4] sm:$0xf]
        %v346 = vld [vmem:[%s298 + $0x8] sm:$0xf]
        %v347 = vld [vmem:[%s298 + $0xc] sm:$0xf]
        %v348 = vld [vmem:[%s298 + $0x10] sm:$0xf]
        %v349 = vld [vmem:[%s298 + $0x14] sm:$0xf]
        %v350 = vld [vmem:[%s298 + $0x18] sm:$0xf]
        %v351 = vld [vmem:[%s298 + $0x1c] sm:$0xf]
        %v352 = vld [vmem:[%s298 + $0x20] sm:$0xf]
        %v353 = vld [vmem:[%s298 + $0x24] sm:$0xf]
        %v354 = vld [vmem:[%s298 + $0x28] sm:$0xf]
        %v355 = vld [vmem:[%s298 + $0x2c] sm:$0xf]
        %v356 = vld [vmem:[%s298 + $0x30] sm:$0xf]
        %v357 = vld [vmem:[%s298 + $0x34] sm:$0xf]
        %v358 = vld [vmem:[%s298 + $0x38] sm:$0xf]
        %v359 = vld [vmem:[%s298 + $0x3c] sm:$0xf]
        %v360 = vld [vmem:[%s298 + $0x40] sm:$0xf]
        %v361 = vld [vmem:[%s298 + $0x44] sm:$0xf]
        %v362 = vld [vmem:[%s298 + $0x48] sm:$0xf]
        %v363 = vld [vmem:[%s298 + $0x4c] sm:$0xf]
        %v364 = vld [vmem:[%s298 + $0x50] sm:$0xf]
        %v365 = vld [vmem:[%s298 + $0x54] sm:$0xf]
        %v366 = vld [vmem:[%s298 + $0x58] sm:$0xf]
        %v367 = vld [vmem:[%s298 + $0x5c] sm:$0xf]
        %v368 = vld [vmem:[%s298 + $0x60] sm:$0xf]
        %v369 = vld [vmem:[%s298 + $0x64] sm:$0xf]
        %v370 = vld [vmem:[%s298 + $0x68] sm:$0xf]
        %v371 = vld [vmem:[%s298 + $0x6c] sm:$0xf]
        %v372 = vld [vmem:[%s298 + $0x70] sm:$0xf]
        %v373 = vld [vmem:[%s298 + $0x74] sm:$0xf]
        %v374 = vld [vmem:[%s298 + $0x78] sm:$0xf]
        %v375 = vld [vmem:[%s298 + $0x7c] sm:$0xf]
        %v376 = vld [vmem:[#allocation5] sm:$0xff]
        %v377 = vld [vmem:[#allocation5 + $0x8] sm:$0xff]
        %v378 = vld [vmem:[#allocation5 + $0x10] sm:$0xff]
        %v379 = vld [vmem:[#allocation5 + $0x18] sm:$0xff]
        %v380 = vld [vmem:[#allocation5 + $0x20] sm:$0xff]
        %v381 = vld [vmem:[#allocation5 + $0x28] sm:$0xff]
        %v382 = vld [vmem:[#allocation5 + $0x30] sm:$0xff]
        %v383 = vld [vmem:[#allocation5 + $0x38] sm:$0xff]
        %v384 = vld [vmem:[#allocation5 + $0x40] sm:$0xff]
        %v385 = vld [vmem:[#allocation5 + $0x48] sm:$0xff]
        %v386 = vld [vmem:[#allocation5 + $0x50] sm:$0xff]
        %v387 = vld [vmem:[#allocation5 + $0x58] sm:$0xff]
        %v388 = vld [vmem:[#allocation5 + $0x60] sm:$0xff]
        %v389 = vld [vmem:[#allocation5 + $0x68] sm:$0xff]
        %v390 = vld [vmem:[#allocation5 + $0x70] sm:$0xff]
        %v391 = vld [vmem:[#allocation5 + $0x78] sm:$0xff]
        %v392 = vld [vmem:[%s2] sm:$0x3]
        %v394 = vlaneseq
        %v395 = vshrl.u32 %v394, 7
        %v396 = vsub.s32 0, %v395
        %v397 = vrot.slane %v392, %v396
        %v398 = vlaneseq
        %v399 = vshrl.u32 %v398, 7
        %v400 = vsub.s32 1, %v399
        %v401 = vrot.slane %v392, %v400
        %v436 = vunpack.c.l.b16 %v344
        %v437 = vunpack.c.l.b16 %v345
        %v438 = vunpack.c.l.b16 %v346
        %v439 = vunpack.c.l.b16 %v347
        %v440 = vunpack.c.l.b16 %v348
        %v441 = vunpack.c.l.b16 %v349
        %v442 = vunpack.c.l.b16 %v350
        %v443 = vunpack.c.l.b16 %v351
        %v444 = vunpack.c.l.b16 %v352
        %v445 = vunpack.c.l.b16 %v353
        %v446 = vunpack.c.l.b16 %v354
        %v447 = vunpack.c.l.b16 %v355
        %v448 = vunpack.c.l.b16 %v356
        %v449 = vunpack.c.l.b16 %v357
        %v450 = vunpack.c.l.b16 %v358
        %v451 = vunpack.c.l.b16 %v359
        %v452 = vunpack.c.l.b16 %v360
        %v453 = vunpack.c.l.b16 %v361
        %v454 = vunpack.c.l.b16 %v362
        %v455 = vunpack.c.l.b16 %v363
        %v456 = vunpack.c.l.b16 %v364
        %v457 = vunpack.c.l.b16 %v365
        %v458 = vunpack.c.l.b16 %v366
        %v459 = vunpack.c.l.b16 %v367
        %v460 = vunpack.c.l.b16 %v368
        %v461 = vunpack.c.l.b16 %v369
        %v462 = vunpack.c.l.b16 %v370
        %v463 = vunpack.c.l.b16 %v371
        %v464 = vunpack.c.l.b16 %v372
        %v465 = vunpack.c.l.b16 %v373
        %v466 = vunpack.c.l.b16 %v374
        %v467 = vunpack.c.l.b16 %v375
        %v468 = vpack.c.b16 %v437, %v436
        %v469 = vpack.c.b16 %v439, %v438
        %v470 = vpack.c.b16 %v441, %v440
        %v471 = vpack.c.b16 %v443, %v442
        %v472 = vpack.c.b16 %v445, %v444
        %v473 = vpack.c.b16 %v447, %v446
        %v474 = vpack.c.b16 %v449, %v448
        %v475 = vpack.c.b16 %v451, %v450
        %v476 = vpack.c.b16 %v453, %v452
        %v477 = vpack.c.b16 %v455, %v454
        %v478 = vpack.c.b16 %v457, %v456
        %v479 = vpack.c.b16 %v459, %v458
        %v480 = vpack.c.b16 %v461, %v460
        %v481 = vpack.c.b16 %v463, %v462
        %v482 = vpack.c.b16 %v465, %v464
        %v483 = vpack.c.b16 %v467, %v466
        %v516 = vunpack.c.l.b16 %v376
        %v517 = vunpack.c.h.b16 %v376
        %v518 = vunpack.c.l.b16 %v377
        %v519 = vunpack.c.h.b16 %v377
        %v520 = vunpack.c.l.b16 %v378
        %v521 = vunpack.c.h.b16 %v378
        %v522 = vunpack.c.l.b16 %v379
        %v523 = vunpack.c.h.b16 %v379
        %v524 = vunpack.c.l.b16 %v380
        %v525 = vunpack.c.h.b16 %v380
        %v526 = vunpack.c.l.b16 %v381
        %v527 = vunpack.c.h.b16 %v381
        %v528 = vunpack.c.l.b16 %v382
        %v529 = vunpack.c.h.b16 %v382
        %v530 = vunpack.c.l.b16 %v383
        %v531 = vunpack.c.h.b16 %v383
        %v532 = vunpack.c.l.b16 %v384
        %v533 = vunpack.c.h.b16 %v384
        %v534 = vunpack.c.l.b16 %v385
        %v535 = vunpack.c.h.b16 %v385
        %v536 = vunpack.c.l.b16 %v386
        %v537 = vunpack.c.h.b16 %v386
        %v538 = vunpack.c.l.b16 %v387
        %v539 = vunpack.c.h.b16 %v387
        %v540 = vunpack.c.l.b16 %v388
        %v541 = vunpack.c.h.b16 %v388
        %v542 = vunpack.c.l.b16 %v389
        %v543 = vunpack.c.h.b16 %v389
        %v544 = vunpack.c.l.b16 %v390
        %v545 = vunpack.c.h.b16 %v390
        %v546 = vunpack.c.l.b16 %v391
        %v547 = vunpack.c.h.b16 %v391
        %v548 = vpack.c.b16 %v518, %v516
        %v549 = vpack.c.b16 %v519, %v517
        %v550 = vpack.c.b16 %v522, %v520
        %v551 = vpack.c.b16 %v523, %v521
        %v552 = vpack.c.b16 %v526, %v524
        %v553 = vpack.c.b16 %v527, %v525
        %v554 = vpack.c.b16 %v530, %v528
        %v555 = vpack.c.b16 %v531, %v529
        %v556 = vpack.c.b16 %v534, %v532
        %v557 = vpack.c.b16 %v535, %v533
        %v558 = vpack.c.b16 %v538, %v536
        %v559 = vpack.c.b16 %v539, %v537
        %v560 = vpack.c.b16 %v542, %v540
        %v561 = vpack.c.b16 %v543, %v541
        %v562 = vpack.c.b16 %v546, %v544
        %v563 = vpack.c.b16 %v547, %v545
        %580 = vmatprep.subr.bf16.mxu0 %v563
        %581 = vmatpush1.bf16.msra.mxu0 %v562
        %582 = vmatprep.subr.bf16.mxu0 %v561
        %583 = vmatpush1.bf16.msra.mxu0 %v560
        %584 = vmatprep.subr.bf16.mxu0 %v559
        %585 = vmatpush1.bf16.msra.mxu0 %v558
        %586 = vmatprep.subr.bf16.mxu0 %v557
        %587 = vmatpush1.bf16.msra.mxu0 %v556
        %588 = vmatprep.subr.bf16.mxu0 %v555
        %589 = vmatpush1.bf16.msra.mxu0 %v554
        %590 = vmatprep.subr.bf16.mxu0 %v553
        %591 = vmatpush1.bf16.msra.mxu0 %v552
        %592 = vmatprep.subr.bf16.mxu0 %v551
        %593 = vmatpush1.bf16.msra.mxu0 %v550
        %594 = vmatprep.subr.bf16.mxu0 %v549
        %595 = vmatpush1.bf16.msra.mxu0 %v548
        %596 = vmatprep.subr.bf16.mxu0 0
        %597 = vmatpush2.bf16.msra.mxu0 0
        %598 = vmatprep.subr.bf16.mxu0 0
        %599 = vmatpush2.bf16.msra.mxu0 0
        %600 = vmatprep.subr.bf16.mxu0 0
        %601 = vmatpush2.bf16.msra.mxu0 0
        %602 = vmatprep.subr.bf16.mxu0 0
        %603 = vmatpush2.bf16.msra.mxu0 0
        %604 = vmatprep.subr.bf16.mxu0 0
        %605 = vmatpush2.bf16.msra.mxu0 0
        %606 = vmatprep.subr.bf16.mxu0 0
        %607 = vmatpush2.bf16.msra.mxu0 0
        %608 = vmatprep.subr.bf16.mxu0 0
        %609 = vmatpush2.bf16.msra.mxu0 0
        %610 = vmatprep.subr.bf16.mxu0 0
        %611 = vmatpush2.bf16.msra.mxu0 0
        %612 = vmatprep.mubr.bf16.mxu0 0
        %613 = vmatmul.mubr.bf16.gmra.mxu0 %v468
        %v614 = vpop.f32.mrf.mxu0
        %v615 = vadd.f32 %v397, %v614
        %v616 = vpop.f32.mrf.mxu0
        %v617 = vadd.f32 %v401, %v616
        %v618 = vpop.f32.mrf.mxu0
        %v619 = vadd.f32 %v397, %v618
        %v620 = vpop.f32.mrf.mxu0
        %v621 = vadd.f32 %v401, %v620
        %622 = vmatprep.mubr.bf16.mxu0 0
        %623 = vmatmul.mubr.bf16.gmra.mxu0 %v469
        %v624 = vpop.f32.mrf.mxu0
        %v625 = vadd.f32 %v397, %v624
        %v626 = vpop.f32.mrf.mxu0
        %v627 = vadd.f32 %v401, %v626
        %v628 = vpop.f32.mrf.mxu0
        %v629 = vadd.f32 %v397, %v628
        %v630 = vpop.f32.mrf.mxu0
        %v631 = vadd.f32 %v401, %v630
        %632 = vmatprep.mubr.bf16.mxu0 0
        %633 = vmatmul.mubr.bf16.gmra.mxu0 %v470
        %v634 = vpop.f32.mrf.mxu0
        %v635 = vadd.f32 %v397, %v634
        %v636 = vpop.f32.mrf.mxu0
        %v637 = vadd.f32 %v401, %v636
        %v638 = vpop.f32.mrf.mxu0
        %v639 = vadd.f32 %v397, %v638
        %v640 = vpop.f32.mrf.mxu0
        %v641 = vadd.f32 %v401, %v640
        %642 = vmatprep.mubr.bf16.mxu0 0
        %643 = vmatmul.mubr.bf16.gmra.mxu0 %v471
        %v644 = vpop.f32.mrf.mxu0
        %v645 = vadd.f32 %v397, %v644
        %v646 = vpop.f32.mrf.mxu0
        %v647 = vadd.f32 %v401, %v646
        %v648 = vpop.f32.mrf.mxu0
        %v649 = vadd.f32 %v397, %v648
        %v650 = vpop.f32.mrf.mxu0
        %v651 = vadd.f32 %v401, %v650
        %652 = vmatprep.mubr.bf16.mxu0 0
        %653 = vmatmul.mubr.bf16.gmra.mxu0 %v472
        %v654 = vpop.f32.mrf.mxu0
        %v655 = vadd.f32 %v397, %v654
        %v656 = vpop.f32.mrf.mxu0
        %v657 = vadd.f32 %v401, %v656
        %v658 = vpop.f32.mrf.mxu0
        %v659 = vadd.f32 %v397, %v658
        %v660 = vpop.f32.mrf.mxu0
        %v661 = vadd.f32 %v401, %v660
        %662 = vmatprep.mubr.bf16.mxu0 0
        %663 = vmatmul.mubr.bf16.gmra.mxu0 %v473
        %v664 = vpop.f32.mrf.mxu0
        %v665 = vadd.f32 %v397, %v664
        %v666 = vpop.f32.mrf.mxu0
        %v667 = vadd.f32 %v401, %v666
        %v668 = vpop.f32.mrf.mxu0
        %v669 = vadd.f32 %v397, %v668
        %v670 = vpop.f32.mrf.mxu0
        %v671 = vadd.f32 %v401, %v670
        %672 = vmatprep.mubr.bf16.mxu0 0
        %673 = vmatmul.mubr.bf16.gmra.mxu0 %v474
        %v674 = vpop.f32.mrf.mxu0
        %v675 = vadd.f32 %v397, %v674
        %v676 = vpop.f32.mrf.mxu0
        %v677 = vadd.f32 %v401, %v676
        %v678 = vpop.f32.mrf.mxu0
        %v679 = vadd.f32 %v397, %v678
        %v680 = vpop.f32.mrf.mxu0
        %v681 = vadd.f32 %v401, %v680
        %682 = vmatprep.mubr.bf16.mxu0 0
        %683 = vmatmul.mubr.bf16.gmra.mxu0 %v475
        %v684 = vpop.f32.mrf.mxu0
        %v685 = vadd.f32 %v397, %v684
        %v686 = vpop.f32.mrf.mxu0
        %v687 = vadd.f32 %v401, %v686
        %v688 = vpop.f32.mrf.mxu0
        %v689 = vadd.f32 %v397, %v688
        %v690 = vpop.f32.mrf.mxu0
        %v691 = vadd.f32 %v401, %v690
        %692 = vmatprep.mubr.bf16.mxu0 0
        %693 = vmatmul.mubr.bf16.gmra.mxu0 %v476
        %v694 = vpop.f32.mrf.mxu0
        %v695 = vadd.f32 %v397, %v694
        %v696 = vpop.f32.mrf.mxu0
        %v697 = vadd.f32 %v401, %v696
        %v698 = vpop.f32.mrf.mxu0
        %v699 = vadd.f32 %v397, %v698
        %v700 = vpop.f32.mrf.mxu0
        %v701 = vadd.f32 %v401, %v700
        %702 = vmatprep.mubr.bf16.mxu0 0
        %703 = vmatmul.mubr.bf16.gmra.mxu0 %v477
        %v704 = vpop.f32.mrf.mxu0
        %v705 = vadd.f32 %v397, %v704
        %v706 = vpop.f32.mrf.mxu0
        %v707 = vadd.f32 %v401, %v706
        %v708 = vpop.f32.mrf.mxu0
        %v709 = vadd.f32 %v397, %v708
        %v710 = vpop.f32.mrf.mxu0
        %v711 = vadd.f32 %v401, %v710
        %712 = vmatprep.mubr.bf16.mxu0 0
        %713 = vmatmul.mubr.bf16.gmra.mxu0 %v478
        %v714 = vpop.f32.mrf.mxu0
        %v715 = vadd.f32 %v397, %v714
        %v716 = vpop.f32.mrf.mxu0
        %v717 = vadd.f32 %v401, %v716
        %v718 = vpop.f32.mrf.mxu0
        %v719 = vadd.f32 %v397, %v718
        %v720 = vpop.f32.mrf.mxu0
        %v721 = vadd.f32 %v401, %v720
        %722 = vmatprep.mubr.bf16.mxu0 0
        %723 = vmatmul.mubr.bf16.gmra.mxu0 %v479
        %v724 = vpop.f32.mrf.mxu0
        %v725 = vadd.f32 %v397, %v724
        %v726 = vpop.f32.mrf.mxu0
        %v727 = vadd.f32 %v401, %v726
        %v728 = vpop.f32.mrf.mxu0
        %v729 = vadd.f32 %v397, %v728
        %v730 = vpop.f32.mrf.mxu0
        %v731 = vadd.f32 %v401, %v730
        %732 = vmatprep.mubr.bf16.mxu0 0
        %733 = vmatmul.mubr.bf16.gmra.mxu0 %v480
        %v734 = vpop.f32.mrf.mxu0
        %v735 = vadd.f32 %v397, %v734
        %v736 = vpop.f32.mrf.mxu0
        %v737 = vadd.f32 %v401, %v736
        %v738 = vpop.f32.mrf.mxu0
        %v739 = vadd.f32 %v397, %v738
        %v740 = vpop.f32.mrf.mxu0
        %v741 = vadd.f32 %v401, %v740
        %742 = vmatprep.mubr.bf16.mxu0 0
        %743 = vmatmul.mubr.bf16.gmra.mxu0 %v481
        %v744 = vpop.f32.mrf.mxu0
        %v745 = vadd.f32 %v397, %v744
        %v746 = vpop.f32.mrf.mxu0
        %v747 = vadd.f32 %v401, %v746
        %v748 = vpop.f32.mrf.mxu0
        %v749 = vadd.f32 %v397, %v748
        %v750 = vpop.f32.mrf.mxu0
        %v751 = vadd.f32 %v401, %v750
        %752 = vmatprep.mubr.bf16.mxu0 0
        %753 = vmatmul.mubr.bf16.gmra.mxu0 %v482
        %v754 = vpop.f32.mrf.mxu0
        %v755 = vadd.f32 %v397, %v754
        %v756 = vpop.f32.mrf.mxu0
        %v757 = vadd.f32 %v401, %v756
        %v758 = vpop.f32.mrf.mxu0
        %v759 = vadd.f32 %v397, %v758
        %v760 = vpop.f32.mrf.mxu0
        %v761 = vadd.f32 %v401, %v760
        %762 = vmatprep.mubr.bf16.mxu0 0
        %763 = vmatmul.mubr.bf16.gmra.mxu0 %v483
        %v764 = vpop.f32.mrf.mxu0
        %v765 = vadd.f32 %v397, %v764
        %v766 = vpop.f32.mrf.mxu0
        %v767 = vadd.f32 %v401, %v766
        %v768 = vpop.f32.mrf.mxu0
        %v769 = vadd.f32 %v397, %v768
        %v770 = vpop.f32.mrf.mxu0
        %v771 = vadd.f32 %v401, %v770
        %772 = vdwg.mxu0
        %v773 = vmax.f32 %v615, 0.0
        %v774 = vmax.f32 %v617, 0.0
        %v775 = vmax.f32 %v619, 0.0
        %v776 = vmax.f32 %v621, 0.0
        %v777 = vmax.f32 %v625, 0.0
        %v778 = vmax.f32 %v627, 0.0
        %v779 = vmax.f32 %v629, 0.0
        %v780 = vmax.f32 %v631, 0.0
        %v781 = vmax.f32 %v635, 0.0
        %v782 = vmax.f32 %v637, 0.0
        %v783 = vmax.f32 %v639, 0.0
        %v784 = vmax.f32 %v641, 0.0
        %v785 = vmax.f32 %v645, 0.0
        %v786 = vmax.f32 %v647, 0.0
        %v787 = vmax.f32 %v649, 0.0
        %v788 = vmax.f32 %v651, 0.0
        %v789 = vmax.f32 %v655, 0.0
        %v790 = vmax.f32 %v657, 0.0
        %v791 = vmax.f32 %v659, 0.0
        %v792 = vmax.f32 %v661, 0.0
        %v793 = vmax.f32 %v665, 0.0
        %v794 = vmax.f32 %v667, 0.0
        %v795 = vmax.f32 %v669, 0.0
        %v796 = vmax.f32 %v671, 0.0
        %v797 = vmax.f32 %v675, 0.0
        %v798 = vmax.f32 %v677, 0.0
        %v799 = vmax.f32 %v679, 0.0
        %v800 = vmax.f32 %v681, 0.0
        %v801 = vmax.f32 %v685, 0.0
        %v802 = vmax.f32 %v687, 0.0
        %v803 = vmax.f32 %v689, 0.0
        %v804 = vmax.f32 %v691, 0.0
        %v805 = vmax.f32 %v695, 0.0
        %v806 = vmax.f32 %v697, 0.0
        %v807 = vmax.f32 %v699, 0.0
        %v808 = vmax.f32 %v701, 0.0
        %v809 = vmax.f32 %v705, 0.0
        %v810 = vmax.f32 %v707, 0.0
        %v811 = vmax.f32 %v709, 0.0
        %v812 = vmax.f32 %v711, 0.0
        %v813 = vmax.f32 %v715, 0.0
        %v814 = vmax.f32 %v717, 0.0
        %v815 = vmax.f32 %v719, 0.0
        %v816 = vmax.f32 %v721, 0.0
        %v817 = vmax.f32 %v725, 0.0
        %v818 = vmax.f32 %v727, 0.0
        %v819 = vmax.f32 %v729, 0.0
        %v820 = vmax.f32 %v731, 0.0
        %v821 = vmax.f32 %v735, 0.0
        %v822 = vmax.f32 %v737, 0.0
        %v823 = vmax.f32 %v739, 0.0
        %v824 = vmax.f32 %v741, 0.0
        %v825 = vmax.f32 %v745, 0.0
        %v826 = vmax.f32 %v747, 0.0
        %v827 = vmax.f32 %v749, 0.0
        %v828 = vmax.f32 %v751, 0.0
        %v829 = vmax.f32 %v755, 0.0
        %v830 = vmax.f32 %v757, 0.0
        %v831 = vmax.f32 %v759, 0.0
        %v832 = vmax.f32 %v761, 0.0
        %v833 = vmax.f32 %v765, 0.0
        %v834 = vmax.f32 %v767, 0.0
        %v835 = vmax.f32 %v769, 0.0
        %v836 = vmax.f32 %v771, 0.0
        %v837 = vpack.c.bf16 %v775, %v773
        %v838 = vpack.c.bf16 %v776, %v774
        %v839 = vpack.c.bf16 %v779, %v777
        %v840 = vpack.c.bf16 %v780, %v778
        %v841 = vpack.c.bf16 %v783, %v781
        %v842 = vpack.c.bf16 %v784, %v782
        %v843 = vpack.c.bf16 %v787, %v785
        %v844 = vpack.c.bf16 %v788, %v786
        %v845 = vpack.c.bf16 %v791, %v789
        %v846 = vpack.c.bf16 %v792, %v790
        %v847 = vpack.c.bf16 %v795, %v793
        %v848 = vpack.c.bf16 %v796, %v794
        %v849 = vpack.c.bf16 %v799, %v797
        %v850 = vpack.c.bf16 %v800, %v798
        %v851 = vpack.c.bf16 %v803, %v801
        %v852 = vpack.c.bf16 %v804, %v802
        %v853 = vpack.c.bf16 %v807, %v805
        %v854 = vpack.c.bf16 %v808, %v806
        %v855 = vpack.c.bf16 %v811, %v809
        %v856 = vpack.c.bf16 %v812, %v810
        %v857 = vpack.c.bf16 %v815, %v813
        %v858 = vpack.c.bf16 %v816, %v814
        %v859 = vpack.c.bf16 %v819, %v817
        %v860 = vpack.c.bf16 %v820, %v818
        %v861 = vpack.c.bf16 %v823, %v821
        %v862 = vpack.c.bf16 %v824, %v822
        %v863 = vpack.c.bf16 %v827, %v825
        %v864 = vpack.c.bf16 %v828, %v826
        %v865 = vpack.c.bf16 %v831, %v829
        %v866 = vpack.c.bf16 %v832, %v830
        %v867 = vpack.c.bf16 %v835, %v833
        %v868 = vpack.c.bf16 %v836, %v834
        %v869 = vld [vmem:[#allocation7] sm:$0xff]
        %v870 = vld [vmem:[#allocation7 + $0x8] sm:$0xff]
        %v871 = vld [vmem:[#allocation7 + $0x10] sm:$0xff]
        %v872 = vld [vmem:[#allocation7 + $0x18] sm:$0xff]
        %v873 = vld [vmem:[#allocation7 + $0x20] sm:$0xff]
        %v874 = vld [vmem:[#allocation7 + $0x28] sm:$0xff]
        %v875 = vld [vmem:[#allocation7 + $0x30] sm:$0xff]
        %v876 = vld [vmem:[#allocation7 + $0x38] sm:$0xff]
        %v877 = vld [vmem:[#allocation7 + $0x40] sm:$0xff]
        %v878 = vld [vmem:[#allocation7 + $0x48] sm:$0xff]
        %v879 = vld [vmem:[#allocation7 + $0x50] sm:$0xff]
        %v880 = vld [vmem:[#allocation7 + $0x58] sm:$0xff]
        %v881 = vld [vmem:[#allocation7 + $0x60] sm:$0xff]
        %v882 = vld [vmem:[#allocation7 + $0x68] sm:$0xff]
        %v883 = vld [vmem:[#allocation7 + $0x70] sm:$0xff]
        %v884 = vld [vmem:[#allocation7 + $0x78] sm:$0xff]
        %v885 = vld [vmem:[#allocation7 + $0x80] sm:$0xff]
        %v886 = vld [vmem:[#allocation7 + $0x88] sm:$0xff]
        %v887 = vld [vmem:[#allocation7 + $0x90] sm:$0xff]
        %v888 = vld [vmem:[#allocation7 + $0x98] sm:$0xff]
        %v889 = vld [vmem:[#allocation7 + $0xa0] sm:$0xff]
        %v890 = vld [vmem:[#allocation7 + $0xa8] sm:$0xff]
        %v891 = vld [vmem:[#allocation7 + $0xb0] sm:$0xff]
        %v892 = vld [vmem:[#allocation7 + $0xb8] sm:$0xff]
        %v893 = vld [vmem:[#allocation7 + $0xc0] sm:$0xff]
        %v894 = vld [vmem:[#allocation7 + $0xc8] sm:$0xff]
        %v895 = vld [vmem:[#allocation7 + $0xd0] sm:$0xff]
        %v896 = vld [vmem:[#allocation7 + $0xd8] sm:$0xff]
        %v897 = vld [vmem:[#allocation7 + $0xe0] sm:$0xff]
        %v898 = vld [vmem:[#allocation7 + $0xe8] sm:$0xff]
        %v899 = vld [vmem:[#allocation7 + $0xf0] sm:$0xff]
        %v900 = vld [vmem:[#allocation7 + $0xf8] sm:$0xff]
        %v901 = vld [vmem:[%s4] sm:$0x3]
        %v903 = vlaneseq
        %v904 = vshrl.u32 %v903, 7
        %v905 = vsub.s32 0, %v904
        %v906 = vrot.slane %v901, %v905
        %v907 = vlaneseq
        %v908 = vshrl.u32 %v907, 7
        %v909 = vsub.s32 1, %v908
        %v910 = vrot.slane %v901, %v909
        %v945 = vunpack.c.l.b16 %v869
        %v946 = vunpack.c.h.b16 %v869
        %v947 = vunpack.c.l.b16 %v870
        %v948 = vunpack.c.h.b16 %v870
        %v949 = vunpack.c.l.b16 %v871
        %v950 = vunpack.c.h.b16 %v871
        %v951 = vunpack.c.l.b16 %v872
        %v952 = vunpack.c.h.b16 %v872
        %v953 = vunpack.c.l.b16 %v873
        %v954 = vunpack.c.h.b16 %v873
        %v955 = vunpack.c.l.b16 %v874
        %v956 = vunpack.c.h.b16 %v874
        %v957 = vunpack.c.l.b16 %v875
        %v958 = vunpack.c.h.b16 %v875
        %v959 = vunpack.c.l.b16 %v876
        %v960 = vunpack.c.h.b16 %v876
        %v961 = vunpack.c.l.b16 %v877
        %v962 = vunpack.c.h.b16 %v877
        %v963 = vunpack.c.l.b16 %v878
        %v964 = vunpack.c.h.b16 %v878
        %v965 = vunpack.c.l.b16 %v879
        %v966 = vunpack.c.h.b16 %v879
        %v967 = vunpack.c.l.b16 %v880
        %v968 = vunpack.c.h.b16 %v880
        %v969 = vunpack.c.l.b16 %v881
        %v970 = vunpack.c.h.b16 %v881
        %v971 = vunpack.c.l.b16 %v882
        %v972 = vunpack.c.h.b16 %v882
        %v973 = vunpack.c.l.b16 %v883
        %v974 = vunpack.c.h.b16 %v883
        %v975 = vunpack.c.l.b16 %v884
        %v976 = vunpack.c.h.b16 %v884
        %v977 = vunpack.c.l.b16 %v885
        %v978 = vunpack.c.h.b16 %v885
        %v979 = vunpack.c.l.b16 %v886
        %v980 = vunpack.c.h.b16 %v886
        %v981 = vunpack.c.l.b16 %v887
        %v982 = vunpack.c.h.b16 %v887
        %v983 = vunpack.c.l.b16 %v888
        %v984 = vunpack.c.h.b16 %v888
        %v985 = vunpack.c.l.b16 %v889
        %v986 = vunpack.c.h.b16 %v889
        %v987 = vunpack.c.l.b16 %v890
        %v988 = vunpack.c.h.b16 %v890
        %v989 = vunpack.c.l.b16 %v891
        %v990 = vunpack.c.h.b16 %v891
        %v991 = vunpack.c.l.b16 %v892
        %v992 = vunpack.c.h.b16 %v892
        %v993 = vunpack.c.l.b16 %v893
        %v994 = vunpack.c.h.b16 %v893
        %v995 = vunpack.c.l.b16 %v894
        %v996 = vunpack.c.h.b16 %v894
        %v997 = vunpack.c.l.b16 %v895
        %v998 = vunpack.c.h.b16 %v895
        %v999 = vunpack.c.l.b16 %v896
        %v1000 = vunpack.c.h.b16 %v896
        %v1001 = vunpack.c.l.b16 %v897
        %v1002 = vunpack.c.h.b16 %v897
        %v1003 = vunpack.c.l.b16 %v898
        %v1004 = vunpack.c.h.b16 %v898
        %v1005 = vunpack.c.l.b16 %v899
        %v1006 = vunpack.c.h.b16 %v899
        %v1007 = vunpack.c.l.b16 %v900
        %v1008 = vunpack.c.h.b16 %v900
        %v1009 = vpack.c.b16 %v947, %v945
        %v1010 = vpack.c.b16 %v948, %v946
        %v1011 = vpack.c.b16 %v951, %v949
        %v1012 = vpack.c.b16 %v952, %v950
        %v1013 = vpack.c.b16 %v955, %v953
        %v1014 = vpack.c.b16 %v956, %v954
        %v1015 = vpack.c.b16 %v959, %v957
        %v1016 = vpack.c.b16 %v960, %v958
        %v1017 = vpack.c.b16 %v963, %v961
        %v1018 = vpack.c.b16 %v964, %v962
        %v1019 = vpack.c.b16 %v967, %v965
        %v1020 = vpack.c.b16 %v968, %v966
        %v1021 = vpack.c.b16 %v971, %v969
        %v1022 = vpack.c.b16 %v972, %v970
        %v1023 = vpack.c.b16 %v975, %v973
        %v1024 = vpack.c.b16 %v976, %v974
        %v1025 = vpack.c.b16 %v979, %v977
        %v1026 = vpack.c.b16 %v980, %v978
        %v1027 = vpack.c.b16 %v983, %v981
        %v1028 = vpack.c.b16 %v984, %v982
        %v1029 = vpack.c.b16 %v987, %v985
        %v1030 = vpack.c.b16 %v988, %v986
        %v1031 = vpack.c.b16 %v991, %v989
        %v1032 = vpack.c.b16 %v992, %v990
        %v1033 = vpack.c.b16 %v995, %v993
        %v1034 = vpack.c.b16 %v996, %v994
        %v1035 = vpack.c.b16 %v999, %v997
        %v1036 = vpack.c.b16 %v1000, %v998
        %v1037 = vpack.c.b16 %v1003, %v1001
        %v1038 = vpack.c.b16 %v1004, %v1002
        %v1039 = vpack.c.b16 %v1007, %v1005
        %v1040 = vpack.c.b16 %v1008, %v1006
        %1073 = vmatprep.subr.bf16.mxu0 %v1024
        %1074 = vmatpush1.bf16.msra.mxu0 %v1023
        %1075 = vmatprep.subr.bf16.mxu0 %v1022
        %1076 = vmatpush1.bf16.msra.mxu0 %v1021
        %1077 = vmatprep.subr.bf16.mxu0 %v1020
        %1078 = vmatpush1.bf16.msra.mxu0 %v1019
        %1079 = vmatprep.subr.bf16.mxu0 %v1018
        %1080 = vmatpush1.bf16.msra.mxu0 %v1017
        %1081 = vmatprep.subr.bf16.mxu0 %v1016
        %1082 = vmatpush1.bf16.msra.mxu0 %v1015
        %1083 = vmatprep.subr.bf16.mxu0 %v1014
        %1084 = vmatpush1.bf16.msra.mxu0 %v1013
        %1085 = vmatprep.subr.bf16.mxu0 %v1012
        %1086 = vmatpush1.bf16.msra.mxu0 %v1011
        %1087 = vmatprep.subr.bf16.mxu0 %v1010
        %1088 = vmatpush1.bf16.msra.mxu0 %v1009
        %1089 = vmatprep.subr.bf16.mxu0 %v1040
        %1090 = vmatpush2.bf16.msra.mxu0 %v1039
        %1091 = vmatprep.subr.bf16.mxu0 %v1038
        %1092 = vmatpush2.bf16.msra.mxu0 %v1037
        %1093 = vmatprep.subr.bf16.mxu0 %v1036
        %1094 = vmatpush2.bf16.msra.mxu0 %v1035
        %1095 = vmatprep.subr.bf16.mxu0 %v1034
        %1096 = vmatpush2.bf16.msra.mxu0 %v1033
        %1097 = vmatprep.subr.bf16.mxu0 %v1032
        %1098 = vmatpush2.bf16.msra.mxu0 %v1031
        %1099 = vmatprep.subr.bf16.mxu0 %v1030
        %1100 = vmatpush2.bf16.msra.mxu0 %v1029
        %1101 = vmatprep.subr.bf16.mxu0 %v1028
        %1102 = vmatpush2.bf16.msra.mxu0 %v1027
        %1103 = vmatprep.subr.bf16.mxu0 %v1026
        %1104 = vmatpush2.bf16.msra.mxu0 %v1025
        %1105 = vmatprep.mubr.bf16.mxu0 %v838
        %1106 = vmatmul.mubr.bf16.gmra.mxu0 %v837
        %v1107 = vpop.f32.mrf.mxu0
        %v1108 = vadd.f32 %v906, %v1107
        %v1109 = vpop.f32.mrf.mxu0
        %v1110 = vadd.f32 %v910, %v1109
        %v1111 = vpop.f32.mrf.mxu0
        %v1112 = vadd.f32 %v906, %v1111
        %v1113 = vpop.f32.mrf.mxu0
        %v1114 = vadd.f32 %v910, %v1113
        %1115 = vmatprep.mubr.bf16.mxu0 %v840
        %1116 = vmatmul.mubr.bf16.gmra.mxu0 %v839
        %v1117 = vpop.f32.mrf.mxu0
        %v1118 = vadd.f32 %v906, %v1117
        %v1119 = vpop.f32.mrf.mxu0
        %v1120 = vadd.f32 %v910, %v1119
        %v1121 = vpop.f32.mrf.mxu0
        %v1122 = vadd.f32 %v906, %v1121
        %v1123 = vpop.f32.mrf.mxu0
        %v1124 = vadd.f32 %v910, %v1123
        %1125 = vmatprep.mubr.bf16.mxu0 %v842
        %1126 = vmatmul.mubr.bf16.gmra.mxu0 %v841
        %v1127 = vpop.f32.mrf.mxu0
        %v1128 = vadd.f32 %v906, %v1127
        %v1129 = vpop.f32.mrf.mxu0
        %v1130 = vadd.f32 %v910, %v1129
        %v1131 = vpop.f32.mrf.mxu0
        %v1132 = vadd.f32 %v906, %v1131
        %v1133 = vpop.f32.mrf.mxu0
        %v1134 = vadd.f32 %v910, %v1133
        %1135 = vmatprep.mubr.bf16.mxu0 %v844
        %1136 = vmatmul.mubr.bf16.gmra.mxu0 %v843
        %v1137 = vpop.f32.mrf.mxu0
        %v1138 = vadd.f32 %v906, %v1137
        %v1139 = vpop.f32.mrf.mxu0
        %v1140 = vadd.f32 %v910, %v1139
        %v1141 = vpop.f32.mrf.mxu0
        %v1142 = vadd.f32 %v906, %v1141
        %v1143 = vpop.f32.mrf.mxu0
        %v1144 = vadd.f32 %v910, %v1143
        %1145 = vmatprep.mubr.bf16.mxu0 %v846
        %1146 = vmatmul.mubr.bf16.gmra.mxu0 %v845
        %v1147 = vpop.f32.mrf.mxu0
        %v1148 = vadd.f32 %v906, %v1147
        %v1149 = vpop.f32.mrf.mxu0
        %v1150 = vadd.f32 %v910, %v1149
        %v1151 = vpop.f32.mrf.mxu0
        %v1152 = vadd.f32 %v906, %v1151
        %v1153 = vpop.f32.mrf.mxu0
        %v1154 = vadd.f32 %v910, %v1153
        %1155 = vmatprep.mubr.bf16.mxu0 %v848
        %1156 = vmatmul.mubr.bf16.gmra.mxu0 %v847
        %v1157 = vpop.f32.mrf.mxu0
        %v1158 = vadd.f32 %v906, %v1157
        %v1159 = vpop.f32.mrf.mxu0
        %v1160 = vadd.f32 %v910, %v1159
        %v1161 = vpop.f32.mrf.mxu0
        %v1162 = vadd.f32 %v906, %v1161
        %v1163 = vpop.f32.mrf.mxu0
        %v1164 = vadd.f32 %v910, %v1163
        %1165 = vmatprep.mubr.bf16.mxu0 %v850
        %1166 = vmatmul.mubr.bf16.gmra.mxu0 %v849
        %v1167 = vpop.f32.mrf.mxu0
        %v1168 = vadd.f32 %v906, %v1167
        %v1169 = vpop.f32.mrf.mxu0
        %v1170 = vadd.f32 %v910, %v1169
        %v1171 = vpop.f32.mrf.mxu0
        %v1172 = vadd.f32 %v906, %v1171
        %v1173 = vpop.f32.mrf.mxu0
        %v1174 = vadd.f32 %v910, %v1173
        %1175 = vmatprep.mubr.bf16.mxu0 %v852
        %1176 = vmatmul.mubr.bf16.gmra.mxu0 %v851
        %v1177 = vpop.f32.mrf.mxu0
        %v1178 = vadd.f32 %v906, %v1177
        %v1179 = vpop.f32.mrf.mxu0
        %v1180 = vadd.f32 %v910, %v1179
        %v1181 = vpop.f32.mrf.mxu0
        %v1182 = vadd.f32 %v906, %v1181
        %v1183 = vpop.f32.mrf.mxu0
        %v1184 = vadd.f32 %v910, %v1183
        %1185 = vmatprep.mubr.bf16.mxu0 %v854
        %1186 = vmatmul.mubr.bf16.gmra.mxu0 %v853
        %v1187 = vpop.f32.mrf.mxu0
        %v1188 = vadd.f32 %v906, %v1187
        %v1189 = vpop.f32.mrf.mxu0
        %v1190 = vadd.f32 %v910, %v1189
        %v1191 = vpop.f32.mrf.mxu0
        %v1192 = vadd.f32 %v906, %v1191
        %v1193 = vpop.f32.mrf.mxu0
        %v1194 = vadd.f32 %v910, %v1193
        %1195 = vmatprep.mubr.bf16.mxu0 %v856
        %1196 = vmatmul.mubr.bf16.gmra.mxu0 %v855
        %v1197 = vpop.f32.mrf.mxu0
        %v1198 = vadd.f32 %v906, %v1197
        %v1199 = vpop.f32.mrf.mxu0
        %v1200 = vadd.f32 %v910, %v1199
        %v1201 = vpop.f32.mrf.mxu0
        %v1202 = vadd.f32 %v906, %v1201
        %v1203 = vpop.f32.mrf.mxu0
        %v1204 = vadd.f32 %v910, %v1203
        %1205 = vmatprep.mubr.bf16.mxu0 %v858
        %1206 = vmatmul.mubr.bf16.gmra.mxu0 %v857
        %v1207 = vpop.f32.mrf.mxu0
        %v1208 = vadd.f32 %v906, %v1207
        %v1209 = vpop.f32.mrf.mxu0
        %v1210 = vadd.f32 %v910, %v1209
        %v1211 = vpop.f32.mrf.mxu0
        %v1212 = vadd.f32 %v906, %v1211
        %v1213 = vpop.f32.mrf.mxu0
        %v1214 = vadd.f32 %v910, %v1213
        %1215 = vmatprep.mubr.bf16.mxu0 %v860
        %1216 = vmatmul.mubr.bf16.gmra.mxu0 %v859
        %v1217 = vpop.f32.mrf.mxu0
        %v1218 = vadd.f32 %v906, %v1217
        %v1219 = vpop.f32.mrf.mxu0
        %v1220 = vadd.f32 %v910, %v1219
        %v1221 = vpop.f32.mrf.mxu0
        %v1222 = vadd.f32 %v906, %v1221
        %v1223 = vpop.f32.mrf.mxu0
        %v1224 = vadd.f32 %v910, %v1223
        %1225 = vmatprep.mubr.bf16.mxu0 %v862
        %1226 = vmatmul.mubr.bf16.gmra.mxu0 %v861
        %v1227 = vpop.f32.mrf.mxu0
        %v1228 = vadd.f32 %v906, %v1227
        %v1229 = vpop.f32.mrf.mxu0
        %v1230 = vadd.f32 %v910, %v1229
        %v1231 = vpop.f32.mrf.mxu0
        %v1232 = vadd.f32 %v906, %v1231
        %v1233 = vpop.f32.mrf.mxu0
        %v1234 = vadd.f32 %v910, %v1233
        %1235 = vmatprep.mubr.bf16.mxu0 %v864
        %1236 = vmatmul.mubr.bf16.gmra.mxu0 %v863
        %v1237 = vpop.f32.mrf.mxu0
        %v1238 = vadd.f32 %v906, %v1237
        %v1239 = vpop.f32.mrf.mxu0
        %v1240 = vadd.f32 %v910, %v1239
        %v1241 = vpop.f32.mrf.mxu0
        %v1242 = vadd.f32 %v906, %v1241
        %v1243 = vpop.f32.mrf.mxu0
        %v1244 = vadd.f32 %v910, %v1243
        %1245 = vmatprep.mubr.bf16.mxu0 %v866
        %1246 = vmatmul.mubr.bf16.gmra.mxu0 %v865
        %v1247 = vpop.f32.mrf.mxu0
        %v1248 = vadd.f32 %v906, %v1247
        %v1249 = vpop.f32.mrf.mxu0
        %v1250 = vadd.f32 %v910, %v1249
        %v1251 = vpop.f32.mrf.mxu0
        %v1252 = vadd.f32 %v906, %v1251
        %v1253 = vpop.f32.mrf.mxu0
        %v1254 = vadd.f32 %v910, %v1253
        %1255 = vmatprep.mubr.bf16.mxu0 %v868
        %1256 = vmatmul.mubr.bf16.gmra.mxu0 %v867
        %v1257 = vpop.f32.mrf.mxu0
        %v1258 = vadd.f32 %v906, %v1257
        %v1259 = vpop.f32.mrf.mxu0
        %v1260 = vadd.f32 %v910, %v1259
        %v1261 = vpop.f32.mrf.mxu0
        %v1262 = vadd.f32 %v906, %v1261
        %v1263 = vpop.f32.mrf.mxu0
        %v1264 = vadd.f32 %v910, %v1263
        %1265 = vdwg.mxu0
        %v1266 = vmax.f32 %v1108, 0.0
        %v1267 = vmax.f32 %v1110, 0.0
        %v1268 = vmax.f32 %v1112, 0.0
        %v1269 = vmax.f32 %v1114, 0.0
        %v1270 = vmax.f32 %v1118, 0.0
        %v1271 = vmax.f32 %v1120, 0.0
        %v1272 = vmax.f32 %v1122, 0.0
        %v1273 = vmax.f32 %v1124, 0.0
        %v1274 = vmax.f32 %v1128, 0.0
        %v1275 = vmax.f32 %v1130, 0.0
        %v1276 = vmax.f32 %v1132, 0.0
        %v1277 = vmax.f32 %v1134, 0.0
        %v1278 = vmax.f32 %v1138, 0.0
        %v1279 = vmax.f32 %v1140, 0.0
        %v1280 = vmax.f32 %v1142, 0.0
        %v1281 = vmax.f32 %v1144, 0.0
        %v1282 = vmax.f32 %v1148, 0.0
        %v1283 = vmax.f32 %v1150, 0.0
        %v1284 = vmax.f32 %v1152, 0.0
        %v1285 = vmax.f32 %v1154, 0.0
        %v1286 = vmax.f32 %v1158, 0.0
        %v1287 = vmax.f32 %v1160, 0.0
        %v1288 = vmax.f32 %v1162, 0.0
        %v1289 = vmax.f32 %v1164, 0.0
        %v1290 = vmax.f32 %v1168, 0.0
        %v1291 = vmax.f32 %v1170, 0.0
        %v1292 = vmax.f32 %v1172, 0.0
        %v1293 = vmax.f32 %v1174, 0.0
        %v1294 = vmax.f32 %v1178, 0.0
        %v1295 = vmax.f32 %v1180, 0.0
        %v1296 = vmax.f32 %v1182, 0.0
        %v1297 = vmax.f32 %v1184, 0.0
        %v1298 = vmax.f32 %v1188, 0.0
        %v1299 = vmax.f32 %v1190, 0.0
        %v1300 = vmax.f32 %v1192, 0.0
        %v1301 = vmax.f32 %v1194, 0.0
        %v1302 = vmax.f32 %v1198, 0.0
        %v1303 = vmax.f32 %v1200, 0.0
        %v1304 = vmax.f32 %v1202, 0.0
        %v1305 = vmax.f32 %v1204, 0.0
        %v1306 = vmax.f32 %v1208, 0.0
        %v1307 = vmax.f32 %v1210, 0.0
        %v1308 = vmax.f32 %v1212, 0.0
        %v1309 = vmax.f32 %v1214, 0.0
        %v1310 = vmax.f32 %v1218, 0.0
        %v1311 = vmax.f32 %v1220, 0.0
        %v1312 = vmax.f32 %v1222, 0.0
        %v1313 = vmax.f32 %v1224, 0.0
        %v1314 = vmax.f32 %v1228, 0.0
        %v1315 = vmax.f32 %v1230, 0.0
        %v1316 = vmax.f32 %v1232, 0.0
        %v1317 = vmax.f32 %v1234, 0.0
        %v1318 = vmax.f32 %v1238, 0.0
        %v1319 = vmax.f32 %v1240, 0.0
        %v1320 = vmax.f32 %v1242, 0.0
        %v1321 = vmax.f32 %v1244, 0.0
        %v1322 = vmax.f32 %v1248, 0.0
        %v1323 = vmax.f32 %v1250, 0.0
        %v1324 = vmax.f32 %v1252, 0.0
        %v1325 = vmax.f32 %v1254, 0.0
        %v1326 = vmax.f32 %v1258, 0.0
        %v1327 = vmax.f32 %v1260, 0.0
        %v1328 = vmax.f32 %v1262, 0.0
        %v1329 = vmax.f32 %v1264, 0.0
        %v1330 = vpack.c.bf16 %v1268, %v1266
        %v1331 = vpack.c.bf16 %v1269, %v1267
        %v1332 = vpack.c.bf16 %v1272, %v1270
        %v1333 = vpack.c.bf16 %v1273, %v1271
        %v1334 = vpack.c.bf16 %v1276, %v1274
        %v1335 = vpack.c.bf16 %v1277, %v1275
        %v1336 = vpack.c.bf16 %v1280, %v1278
        %v1337 = vpack.c.bf16 %v1281, %v1279
        %v1338 = vpack.c.bf16 %v1284, %v1282
        %v1339 = vpack.c.bf16 %v1285, %v1283
        %v1340 = vpack.c.bf16 %v1288, %v1286
        %v1341 = vpack.c.bf16 %v1289, %v1287
        %v1342 = vpack.c.bf16 %v1292, %v1290
        %v1343 = vpack.c.bf16 %v1293, %v1291
        %v1344 = vpack.c.bf16 %v1296, %v1294
        %v1345 = vpack.c.bf16 %v1297, %v1295
        %v1346 = vpack.c.bf16 %v1300, %v1298
        %v1347 = vpack.c.bf16 %v1301, %v1299
        %v1348 = vpack.c.bf16 %v1304, %v1302
        %v1349 = vpack.c.bf16 %v1305, %v1303
        %v1350 = vpack.c.bf16 %v1308, %v1306
        %v1351 = vpack.c.bf16 %v1309, %v1307
        %v1352 = vpack.c.bf16 %v1312, %v1310
        %v1353 = vpack.c.bf16 %v1313, %v1311
        %v1354 = vpack.c.bf16 %v1316, %v1314
        %v1355 = vpack.c.bf16 %v1317, %v1315
        %v1356 = vpack.c.bf16 %v1320, %v1318
        %v1357 = vpack.c.bf16 %v1321, %v1319
        %v1358 = vpack.c.bf16 %v1324, %v1322
        %v1359 = vpack.c.bf16 %v1325, %v1323
        %v1360 = vpack.c.bf16 %v1328, %v1326
        %v1361 = vpack.c.bf16 %v1329, %v1327
        %v1362 = vld [vmem:[#allocation8] sm:$0xf]
        %v1363 = vld [vmem:[#allocation8 + $0x4] sm:$0xf]
        %v1364 = vld [vmem:[#allocation8 + $0x8] sm:$0xf]
        %v1365 = vld [vmem:[#allocation8 + $0xc] sm:$0xf]
        %v1366 = vld [vmem:[#allocation8 + $0x10] sm:$0xf]
        %v1367 = vld [vmem:[#allocation8 + $0x14] sm:$0xf]
        %v1368 = vld [vmem:[#allocation8 + $0x18] sm:$0xf]
        %v1369 = vld [vmem:[#allocation8 + $0x1c] sm:$0xf]
        %v1370 = vld [vmem:[#allocation8 + $0x20] sm:$0xf]
        %v1371 = vld [vmem:[#allocation8 + $0x24] sm:$0xf]
        %v1372 = vld [vmem:[#allocation8 + $0x28] sm:$0xf]
        %v1373 = vld [vmem:[#allocation8 + $0x2c] sm:$0xf]
        %v1374 = vld [vmem:[#allocation8 + $0x30] sm:$0xf]
        %v1375 = vld [vmem:[#allocation8 + $0x34] sm:$0xf]
        %v1376 = vld [vmem:[#allocation8 + $0x38] sm:$0xf]
        %v1377 = vld [vmem:[#allocation8 + $0x3c] sm:$0xf]
        %v1378 = vld [vmem:[#allocation8 + $0x40] sm:$0xf]
        %v1379 = vld [vmem:[#allocation8 + $0x44] sm:$0xf]
        %v1380 = vld [vmem:[#allocation8 + $0x48] sm:$0xf]
        %v1381 = vld [vmem:[#allocation8 + $0x4c] sm:$0xf]
        %v1382 = vld [vmem:[#allocation8 + $0x50] sm:$0xf]
        %v1383 = vld [vmem:[#allocation8 + $0x54] sm:$0xf]
        %v1384 = vld [vmem:[#allocation8 + $0x58] sm:$0xf]
        %v1385 = vld [vmem:[#allocation8 + $0x5c] sm:$0xf]
        %v1386 = vld [vmem:[#allocation8 + $0x60] sm:$0xf]
        %v1387 = vld [vmem:[#allocation8 + $0x64] sm:$0xf]
        %v1388 = vld [vmem:[#allocation8 + $0x68] sm:$0xf]
        %v1389 = vld [vmem:[#allocation8 + $0x6c] sm:$0xf]
        %v1390 = vld [vmem:[#allocation8 + $0x70] sm:$0xf]
        %v1391 = vld [vmem:[#allocation8 + $0x74] sm:$0xf]
        %v1392 = vld [vmem:[#allocation8 + $0x78] sm:$0xf]
        %v1393 = vld [vmem:[#allocation8 + $0x7c] sm:$0xf]
        %v1394 = vld [vmem:[%s6] sm:$0x1]
        %v1396 = vlaneseq
        %v1397 = vshrl.u32 %v1396, 7
        %v1398 = vsub.s32 0, %v1397
        %v1399 = vrot.slane %v1394, %v1398
        %v1433 = vunpack.c.l.b16 %v1362
        %v1434 = vunpack.c.l.b16 %v1363
        %v1435 = vunpack.c.l.b16 %v1364
        %v1436 = vunpack.c.l.b16 %v1365
        %v1437 = vunpack.c.l.b16 %v1366
        %v1438 = vunpack.c.l.b16 %v1367
        %v1439 = vunpack.c.l.b16 %v1368
        %v1440 = vunpack.c.l.b16 %v1369
        %v1441 = vunpack.c.l.b16 %v1370
        %v1442 = vunpack.c.l.b16 %v1371
        %v1443 = vunpack.c.l.b16 %v1372
        %v1444 = vunpack.c.l.b16 %v1373
        %v1445 = vunpack.c.l.b16 %v1374
        %v1446 = vunpack.c.l.b16 %v1375
        %v1447 = vunpack.c.l.b16 %v1376
        %v1448 = vunpack.c.l.b16 %v1377
        %v1449 = vunpack.c.l.b16 %v1378
        %v1450 = vunpack.c.l.b16 %v1379
        %v1451 = vunpack.c.l.b16 %v1380
        %v1452 = vunpack.c.l.b16 %v1381
        %v1453 = vunpack.c.l.b16 %v1382
        %v1454 = vunpack.c.l.b16 %v1383
        %v1455 = vunpack.c.l.b16 %v1384
        %v1456 = vunpack.c.l.b16 %v1385
        %v1457 = vunpack.c.l.b16 %v1386
        %v1458 = vunpack.c.l.b16 %v1387
        %v1459 = vunpack.c.l.b16 %v1388
        %v1460 = vunpack.c.l.b16 %v1389
        %v1461 = vunpack.c.l.b16 %v1390
        %v1462 = vunpack.c.l.b16 %v1391
        %v1463 = vunpack.c.l.b16 %v1392
        %v1464 = vunpack.c.l.b16 %v1393
        %v1465 = vpack.c.b16 %v1434, %v1433
        %v1466 = vpack.c.b16 %v1436, %v1435
        %v1467 = vpack.c.b16 %v1438, %v1437
        %v1468 = vpack.c.b16 %v1440, %v1439
        %v1469 = vpack.c.b16 %v1442, %v1441
        %v1470 = vpack.c.b16 %v1444, %v1443
        %v1471 = vpack.c.b16 %v1446, %v1445
        %v1472 = vpack.c.b16 %v1448, %v1447
        %v1473 = vpack.c.b16 %v1450, %v1449
        %v1474 = vpack.c.b16 %v1452, %v1451
        %v1475 = vpack.c.b16 %v1454, %v1453
        %v1476 = vpack.c.b16 %v1456, %v1455
        %v1477 = vpack.c.b16 %v1458, %v1457
        %v1478 = vpack.c.b16 %v1460, %v1459
        %v1479 = vpack.c.b16 %v1462, %v1461
        %v1480 = vpack.c.b16 %v1464, %v1463
        %1497 = vmatprep.subr.bf16.mxu0 0
        %1498 = vmatpush1.bf16.msra.mxu0 %v1472
        %1499 = vmatprep.subr.bf16.mxu0 0
        %1500 = vmatpush1.bf16.msra.mxu0 %v1471
        %1501 = vmatprep.subr.bf16.mxu0 0
        %1502 = vmatpush1.bf16.msra.mxu0 %v1470
        %1503 = vmatprep.subr.bf16.mxu0 0
        %1504 = vmatpush1.bf16.msra.mxu0 %v1469
        %1505 = vmatprep.subr.bf16.mxu0 0
        %1506 = vmatpush1.bf16.msra.mxu0 %v1468
        %1507 = vmatprep.subr.bf16.mxu0 0
        %1508 = vmatpush1.bf16.msra.mxu0 %v1467
        %1509 = vmatprep.subr.bf16.mxu0 0
        %1510 = vmatpush1.bf16.msra.mxu0 %v1466
        %1511 = vmatprep.subr.bf16.mxu0 0
        %1512 = vmatpush1.bf16.msra.mxu0 %v1465
        %1513 = vmatprep.subr.bf16.mxu0 0
        %1514 = vmatpush2.bf16.msra.mxu0 %v1480
        %1515 = vmatprep.subr.bf16.mxu0 0
        %1516 = vmatpush2.bf16.msra.mxu0 %v1479
        %1517 = vmatprep.subr.bf16.mxu0 0
        %1518 = vmatpush2.bf16.msra.mxu0 %v1478
        %1519 = vmatprep.subr.bf16.mxu0 0
        %1520 = vmatpush2.bf16.msra.mxu0 %v1477
        %1521 = vmatprep.subr.bf16.mxu0 0
        %1522 = vmatpush2.bf16.msra.mxu0 %v1476
        %1523 = vmatprep.subr.bf16.mxu0 0
        %1524 = vmatpush2.bf16.msra.mxu0 %v1475
        %1525 = vmatprep.subr.bf16.mxu0 0
        %1526 = vmatpush2.bf16.msra.mxu0 %v1474
        %1527 = vmatprep.subr.bf16.mxu0 0
        %1528 = vmatpush2.bf16.msra.mxu0 %v1473
        %1529 = vmatprep.mubr.bf16.mxu0 %v1331
        %1530 = vmatmul.mubr.bf16.gmra.mxu0 %v1330
        %v1531 = vpop.f32.mrf.mxu0
        %v1532 = vadd.f32 %v1399, %v1531
        %v1533 = vpop.f32.mrf.mxu0
        %v1534 = vpop.f32.mrf.mxu0
        %v1535 = vadd.f32 %v1399, %v1534
        %v1536 = vpop.f32.mrf.mxu0
        %1537 = vmatprep.mubr.bf16.mxu0 %v1333
        %1538 = vmatmul.mubr.bf16.gmra.mxu0 %v1332
        %v1539 = vpop.f32.mrf.mxu0
        %v1540 = vadd.f32 %v1399, %v1539
        %v1541 = vpop.f32.mrf.mxu0
        %v1542 = vpop.f32.mrf.mxu0
        %v1543 = vadd.f32 %v1399, %v1542
        %v1544 = vpop.f32.mrf.mxu0
        %1545 = vmatprep.mubr.bf16.mxu0 %v1335
        %1546 = vmatmul.mubr.bf16.gmra.mxu0 %v1334
        %v1547 = vpop.f32.mrf.mxu0
        %v1548 = vadd.f32 %v1399, %v1547
        %v1549 = vpop.f32.mrf.mxu0
        %v1550 = vpop.f32.mrf.mxu0
        %v1551 = vadd.f32 %v1399, %v1550
        %v1552 = vpop.f32.mrf.mxu0
        %1553 = vmatprep.mubr.bf16.mxu0 %v1337
        %1554 = vmatmul.mubr.bf16.gmra.mxu0 %v1336
        %v1555 = vpop.f32.mrf.mxu0
        %v1556 = vadd.f32 %v1399, %v1555
        %v1557 = vpop.f32.mrf.mxu0
        %v1558 = vpop.f32.mrf.mxu0
        %v1559 = vadd.f32 %v1399, %v1558
        %v1560 = vpop.f32.mrf.mxu0
        %1561 = vmatprep.mubr.bf16.mxu0 %v1339
        %1562 = vmatmul.mubr.bf16.gmra.mxu0 %v1338
        %v1563 = vpop.f32.mrf.mxu0
        %v1564 = vadd.f32 %v1399, %v1563
        %v1565 = vpop.f32.mrf.mxu0
        %v1566 = vpop.f32.mrf.mxu0
        %v1567 = vadd.f32 %v1399, %v1566
        %v1568 = vpop.f32.mrf.mxu0
        %1569 = vmatprep.mubr.bf16.mxu0 %v1341
        %1570 = vmatmul.mubr.bf16.gmra.mxu0 %v1340
        %v1571 = vpop.f32.mrf.mxu0
        %v1572 = vadd.f32 %v1399, %v1571
        %v1573 = vpop.f32.mrf.mxu0
        %v1574 = vpop.f32.mrf.mxu0
        %v1575 = vadd.f32 %v1399, %v1574
        %v1576 = vpop.f32.mrf.mxu0
        %1577 = vmatprep.mubr.bf16.mxu0 %v1343
        %1578 = vmatmul.mubr.bf16.gmra.mxu0 %v1342
        %v1579 = vpop.f32.mrf.mxu0
        %v1580 = vadd.f32 %v1399, %v1579
        %v1581 = vpop.f32.mrf.mxu0
        %v1582 = vpop.f32.mrf.mxu0
        %v1583 = vadd.f32 %v1399, %v1582
        %v1584 = vpop.f32.mrf.mxu0
        %1585 = vmatprep.mubr.bf16.mxu0 %v1345
        %1586 = vmatmul.mubr.bf16.gmra.mxu0 %v1344
        %v1587 = vpop.f32.mrf.mxu0
        %v1588 = vadd.f32 %v1399, %v1587
        %v1589 = vpop.f32.mrf.mxu0
        %v1590 = vpop.f32.mrf.mxu0
        %v1591 = vadd.f32 %v1399, %v1590
        %v1592 = vpop.f32.mrf.mxu0
        %1593 = vmatprep.mubr.bf16.mxu0 %v1347
        %1594 = vmatmul.mubr.bf16.gmra.mxu0 %v1346
        %v1595 = vpop.f32.mrf.mxu0
        %v1596 = vadd.f32 %v1399, %v1595
        %v1597 = vpop.f32.mrf.mxu0
        %v1598 = vpop.f32.mrf.mxu0
        %v1599 = vadd.f32 %v1399, %v1598
        %v1600 = vpop.f32.mrf.mxu0
        %1601 = vmatprep.mubr.bf16.mxu0 %v1349
        %1602 = vmatmul.mubr.bf16.gmra.mxu0 %v1348
        %v1603 = vpop.f32.mrf.mxu0
        %v1604 = vadd.f32 %v1399, %v1603
        %v1605 = vpop.f32.mrf.mxu0
        %v1606 = vpop.f32.mrf.mxu0
        %v1607 = vadd.f32 %v1399, %v1606
        %v1608 = vpop.f32.mrf.mxu0
        %1609 = vmatprep.mubr.bf16.mxu0 %v1351
        %1610 = vmatmul.mubr.bf16.gmra.mxu0 %v1350
        %v1611 = vpop.f32.mrf.mxu0
        %v1612 = vadd.f32 %v1399, %v1611
        %v1613 = vpop.f32.mrf.mxu0
        %v1614 = vpop.f32.mrf.mxu0
        %v1615 = vadd.f32 %v1399, %v1614
        %v1616 = vpop.f32.mrf.mxu0
        %1617 = vmatprep.mubr.bf16.mxu0 %v1353
        %1618 = vmatmul.mubr.bf16.gmra.mxu0 %v1352
        %v1619 = vpop.f32.mrf.mxu0
        %v1620 = vadd.f32 %v1399, %v1619
        %v1621 = vpop.f32.mrf.mxu0
        %v1622 = vpop.f32.mrf.mxu0
        %v1623 = vadd.f32 %v1399, %v1622
        %v1624 = vpop.f32.mrf.mxu0
        %1625 = vmatprep.mubr.bf16.mxu0 %v1355
        %1626 = vmatmul.mubr.bf16.gmra.mxu0 %v1354
        %v1627 = vpop.f32.mrf.mxu0
        %v1628 = vadd.f32 %v1399, %v1627
        %v1629 = vpop.f32.mrf.mxu0
        %v1630 = vpop.f32.mrf.mxu0
        %v1631 = vadd.f32 %v1399, %v1630
        %v1632 = vpop.f32.mrf.mxu0
        %1633 = vmatprep.mubr.bf16.mxu0 %v1357
        %1634 = vmatmul.mubr.bf16.gmra.mxu0 %v1356
        %v1635 = vpop.f32.mrf.mxu0
        %v1636 = vadd.f32 %v1399, %v1635
        %v1637 = vpop.f32.mrf.mxu0
        %v1638 = vpop.f32.mrf.mxu0
        %v1639 = vadd.f32 %v1399, %v1638
        %v1640 = vpop.f32.mrf.mxu0
        %1641 = vmatprep.mubr.bf16.mxu0 %v1359
        %1642 = vmatmul.mubr.bf16.gmra.mxu0 %v1358
        %v1643 = vpop.f32.mrf.mxu0
        %v1644 = vadd.f32 %v1399, %v1643
        %v1645 = vpop.f32.mrf.mxu0
        %v1646 = vpop.f32.mrf.mxu0
        %v1647 = vadd.f32 %v1399, %v1646
        %v1648 = vpop.f32.mrf.mxu0
        %1649 = vmatprep.mubr.bf16.mxu0 %v1361
        %1650 = vmatmul.mubr.bf16.gmra.mxu0 %v1360
        %v1651 = vpop.f32.mrf.mxu0
        %v1652 = vadd.f32 %v1399, %v1651
        %v1653 = vpop.f32.mrf.mxu0
        %v1654 = vpop.f32.mrf.mxu0
        %v1655 = vadd.f32 %v1399, %v1654
        %v1656 = vpop.f32.mrf.mxu0
        %1657 = vdwg.mxu0
        %1658 = vst [vmem:[%s340] sm:$0xff] %v1532
        %1659 = vst [vmem:[%s340 + $0x8] sm:$0xff] %v1535
        %1660 = vst [vmem:[%s340 + $0x10] sm:$0xff] %v1540
        %1661 = vst [vmem:[%s340 + $0x18] sm:$0xff] %v1543
        %1662 = vst [vmem:[%s340 + $0x20] sm:$0xff] %v1548
        %1663 = vst [vmem:[%s340 + $0x28] sm:$0xff] %v1551
        %1664 = vst [vmem:[%s340 + $0x30] sm:$0xff] %v1556
        %1665 = vst [vmem:[%s340 + $0x38] sm:$0xff] %v1559
        %1666 = vst [vmem:[%s340 + $0x40] sm:$0xff] %v1564
        %1667 = vst [vmem:[%s340 + $0x48] sm:$0xff] %v1567
        %1668 = vst [vmem:[%s340 + $0x50] sm:$0xff] %v1572
        %1669 = vst [vmem:[%s340 + $0x58] sm:$0xff] %v1575
        %1670 = vst [vmem:[%s340 + $0x60] sm:$0xff] %v1580
        %1671 = vst [vmem:[%s340 + $0x68] sm:$0xff] %v1583
        %1672 = vst [vmem:[%s340 + $0x70] sm:$0xff] %v1588
        %1673 = vst [vmem:[%s340 + $0x78] sm:$0xff] %v1591
        %1674 = vst [vmem:[%s340 + $0x80] sm:$0xff] %v1596
        %1675 = vst [vmem:[%s340 + $0x88] sm:$0xff] %v1599
        %1676 = vst [vmem:[%s340 + $0x90] sm:$0xff] %v1604
        %1677 = vst [vmem:[%s340 + $0x98] sm:$0xff] %v1607
        %1678 = vst [vmem:[%s340 + $0xa0] sm:$0xff] %v1612
        %1679 = vst [vmem:[%s340 + $0xa8] sm:$0xff] %v1615
        %1680 = vst [vmem:[%s340 + $0xb0] sm:$0xff] %v1620
        %1681 = vst [vmem:[%s340 + $0xb8] sm:$0xff] %v1623
        %1682 = vst [vmem:[%s340 + $0xc0] sm:$0xff] %v1628
        %1683 = vst [vmem:[%s340 + $0xc8] sm:$0xff] %v1631
        %1684 = vst [vmem:[%s340 + $0xd0] sm:$0xff] %v1636
        %1685 = vst [vmem:[%s340 + $0xd8] sm:$0xff] %v1639
        %1686 = vst [vmem:[%s340 + $0xe0] sm:$0xff] %v1644
        %1687 = vst [vmem:[%s340 + $0xe8] sm:$0xff] %v1647
        %1688 = vst [vmem:[%s340 + $0xf0] sm:$0xff] %v1652
        %1689 = vst [vmem:[%s340 + $0xf8] sm:$0xff] %v1655
        %s1690 = sand.u32 %s186, 1
        %s1691 = scalar_lea.sflag [#allocation4], %s1690
        %s1692 = sand.u32 %s186, 1
        %s1693 = smul.addr %s1692, 256
        %s1694 = scalar_lea.vmem [#allocation10], %s1693
        // Predicated region
        $region65: #{tpu_custom_call.1} parent=47 // pred_check
          %p1695 = pneg %p196
        $region66: #{tpu_custom_call.1} parent=47 // pred_check_branch
          %1697 = sbr.rel (%p1695) target = $region68
        $region67: #{tpu_custom_call.1} parent=47 // pred_region
          %s1698 = smul.u32 32, %s26
          %s1700 = ssub.s32 4096, 4096
          %1701 = vsyncadd %s1691, %s1700
          %s1702 = smul.addr %s1698, 128
          %s1703 = scalar_lea.hbm %s7, %s1702
          %s1704 = sshll.u32 %s1694, 4
          %s1705 = int_to_ptr.vmem [resolvable:$true] %s1704
          %1710 = dma.vmem_to_hbm [thread:$0]  %s1705, 4096, %s1703, %s1691, 128, 128, 8
        $region68: #{tpu_custom_call.1} parent=47 // pred_fallthru
          _
      $region48: #{tpu_custom_call.1} parent=5 // pred_fallthru
        _
      %p1711 = scmp.le.s32.totalorder 2, %s21
      // Predicated region
      $region69: #{tpu_custom_call.1} parent=5 // pred_check
        %p1712 = pneg %p1711
      $region70: #{tpu_custom_call.1} parent=5 // pred_check_branch
        %1714 = sbr.rel (%p1712) target = $region72
      $region71: #{tpu_custom_call.1} parent=5 // pred_region
        %s1715 = ssub.s32 %s21, 2
        // Predicated region
        $region73: #{tpu_custom_call.1} parent=71 // pred_check
          %p1716 = pneg %p202
        $region74: #{tpu_custom_call.1} parent=71 // pred_check_branch
          %1718 = sbr.rel (%p1716) target = $region76
        $region75: #{tpu_custom_call.1} parent=71 // pred_region
          %s1719 = sand.u32 %s187, 1
          %s1720 = scalar_lea.sflag [#allocation4], %s1719
          %s1721 = sand.u32 %s187, 1
          %s1722 = smul.addr %s1721, 256
          %s1723 = scalar_lea.vmem [#allocation10], %s1722
          %1724 = dma.done %s1720, 4096
        $region76: #{tpu_custom_call.1} parent=71 // pred_fallthru
          _
      $region72: #{tpu_custom_call.1} parent=5 // pred_fallthru
        _
    $region6: #{tpu_custom_call.1} parent=1 // loop_footer
      %s25 = sadd.s32 1, %s21
    $region7: #{tpu_custom_call.1} parent=1 // loop_footer_branch
      %20 = sbr.rel target = $region3
    $region8: #{tpu_custom_call.1} parent=1 // loop_exit
      _
    %1725 = vsyncpa [#allocation3], 1
    %s1726 = scalar_lea.sflag [#allocation3], 1
    %1727 = vsyncpa %s1726, 1
    %1728 = vsyncpa [#allocation6], 1
    %1729 = vsyncpa [#allocation9], 1
    %1730 = vsyncpa [#allocation4], 1
    %s1731 = scalar_lea.sflag [#allocation4], 1
    %1732 = vsyncpa %s1731, 1

</llo_original>
